<compile_context>
chip_gen: v7x
topology: tpu7x:2x2x1
jax: 0.10.0
libtpu: 0.0.40
codegen_flags: <defaults>
</compile_context>

<pallas_src>
import jax
import jax.numpy as jnp
from jax.experimental import pallas as pl
from jax.experimental.pallas import tpu as pltpu


def _round_up(x, m):
    return ((x + m - 1) // m) * m


def _vmem_capacity_bytes():
    # Generation-aware VMEM budget (v5e/v6e: 128 MiB, v7x: 64 MiB per TC).
    try:
        info = pltpu.get_tpu_info()
        return int(getattr(info, "vmem_capacity_bytes", 64 * 1024 * 1024))
    except Exception:
        return 64 * 1024 * 1024


def _choose_tile(rows, max_tile):
    """Row tile (multiple of 8) + padded row count; when possible produce
    >= 2 grid steps so v7x's two TensorCores can both be used."""
    rp = _round_up(max(rows, 8), 8)
    tile = min(rp, max(8, (max_tile // 8) * 8))
    if rp // tile < 2 and rp > 8:
        tile = _round_up(rp // 2, 8)
    rp = _round_up(rp, tile)
    return tile, rp


# ----------------------------------------------------------------------------
# Kernel 1: y = LeakyReLU_0.2(x @ W + b)          (the GraphAtt `proj` branch)
# ----------------------------------------------------------------------------
def _linear_lrelu_kernel(x_ref, w_ref, b_ref, o_ref):
    # bf16 MXU operands, f32 accumulation; LeakyReLU(0.2) as a single maximum.
    y = jnp.dot(x_ref[...].astype(jnp.bfloat16), w_ref[...],
                preferred_element_type=jnp.float32) + b_ref[...]
    o_ref[...] = jnp.maximum(y, 0.2 * y)


def linear_lrelu(x, w_bf16, b, max_tile=1024):
    R, Din = x.shape
    Dout = w_bf16.shape[1]
    tile, Rp = _choose_tile(R, max_tile)          # big row tiles (HBM-bound kernel)
    xp = jnp.pad(x, ((0, Rp - R), (0, 0))) if Rp != R else x
    out = pl.pallas_call(
        _linear_lrelu_kernel,
        out_shape=jax.ShapeDtypeStruct((Rp, Dout), jnp.float32),
        grid_spec=pltpu.PrefetchScalarGridSpec(
            num_scalar_prefetch=0,
            grid=(Rp // tile,),
            in_specs=[pl.BlockSpec((tile, Din), lambda i: (i, 0)),
                      pl.BlockSpec((Din, Dout), lambda i: (0, 0)),    # bf16 weights
                      pl.BlockSpec((1, Dout), lambda i: (0, 0))],
            out_specs=pl.BlockSpec((tile, Dout), lambda i: (i, 0))),
        compiler_params=pltpu.CompilerParams(dimension_semantics=("parallel",)),
    )(xp, w_bf16, b.reshape(1, Dout))
    return out[:R] if Rp != R else out


# ----------------------------------------------------------------------------
# Kernel 2 (fused): attention MLP + masked softmax over K + weighted aggregation
#   h      = LeakyReLU_0.2( q @ W1_q + b1 (once/source)  +  cat(k,aux) @ W1_ka )
#   score  = sum_H(h * w2)                       (VPU reduce, no 1-wide matmul;
#                                                 b2 dropped: softmax shift-inv.)
#   probs  = softmax(where(mask, score, -1e6))
#   out    = sum_K(probs * vals)                 (VPU broadcast-mul + reduce)
# ----------------------------------------------------------------------------
def _fused_attn_kernel(q_ref, ka_ref, mask_ref, val_ref,
                       w1q_ref, w1ka_ref, b1_ref, w2_ref, o_ref):
    TS = q_ref.shape[0]
    K = mask_ref.shape[1]
    H = w1q_ref.shape[1]

    # Query half of the attention MLP + b1: computed once per SOURCE, not per edge.
    hq = jnp.dot(q_ref[...].astype(jnp.bfloat16), w1q_ref[...],
                 preferred_element_type=jnp.float32) + b1_ref[...]          # [TS, H]

    # Per-edge half: single bf16 MXU matmul over cat(key, aux) (already 2-D).
    he = jnp.dot(ka_ref[...], w1ka_ref[...],
                 preferred_element_type=jnp.float32)                        # [TS*K, H]
    h = he.reshape(TS, K, H) + hq[:, None, :]
    h = jnp.maximum(h, 0.2 * h)                                             # LeakyReLU(0.2)

    # Second linear (H -> 1) as VPU multiply + lane reduction; stays in VMEM.
    scores = jnp.sum(h * w2_ref[...], axis=-1)                              # [TS, K]

    # Masked softmax over K (fill = -1e6, as in masked_softmax_); exact denom.
    s = jnp.where(mask_ref[...] > 0.5, scores, jnp.float32(-1000000.0))
    s = s - jnp.max(s, axis=-1, keepdims=True)
    e = jnp.exp(s)
    p = e / jnp.sum(e, axis=-1, keepdims=True)                              # [TS, K]

    # Weighted aggregation: K is tiny, so a VPU broadcast-multiply + sublane
    # reduce beats TS serialized M=1 MXU matmuls.
    o_ref[...] = jnp.sum(p[:, :, None] * val_ref[...], axis=1)              # [TS, Cout]


def fused_attn_agg(q_feat, key_aux, mask, vals, w1q, w1ka, b1, w2_row):
    S, K, Cka = key_aux.shape
    C = q_feat.shape[-1]
    Cout = vals.shape[-1]
    H = w1q.shape[1]

    # Generation-aware tile & VMEM limit: the dominant live tensor is the f32
    # hidden [TS, K, H]; double-buffered inputs come on top of it.
    vmem_limit = min(int(_vmem_capacity_bytes() * 0.75), 100 * 1024 * 1024)
    bytes_per_src = (K * H * 4                                 # hidden (f32)
                     + 2 * (K * Cka * 2 + K * Cout * 4         # ka (bf16) + vals (f32), dbl-buffered
                            + C * 4 + K * 4 + Cout * 4))       # q + mask + out
    max_tile = max(8, min(512, int(vmem_limit * 0.5) // bytes_per_src))

    TS, Sp = _choose_tile(S, max_tile)
    if Sp != S:
        pad = Sp - S
        q_feat = jnp.pad(q_feat, ((0, pad), (0, 0)))
        key_aux = jnp.pad(key_aux, ((0, pad), (0, 0), (0, 0)))
        mask = jnp.pad(mask, ((0, pad), (0, 0)))
        vals = jnp.pad(vals, ((0, pad), (0, 0), (0, 0)))
    # Row-major flatten in the wrapper so the kernel gets a 2-D edge operand
    # (no in-kernel bf16 relayout before the matmul).
    ka2 = key_aux.reshape(Sp * K, Cka)

    out = pl.pallas_call(
        _fused_attn_kernel,
        out_shape=jax.ShapeDtypeStruct((Sp, Cout), jnp.float32),
        grid_spec=pltpu.PrefetchScalarGridSpec(
            num_scalar_prefetch=0,
            grid=(Sp // TS,),
            in_specs=[pl.BlockSpec((TS, C), lambda i: (i, 0)),            # query feats (f32)
                      pl.BlockSpec((TS * K, Cka), lambda i: (i, 0)),      # cat(key, aux) edges (bf16)
                      pl.BlockSpec((TS, K), lambda i: (i, 0)),            # mask
                      pl.BlockSpec((TS, K, Cout), lambda i: (i, 0, 0)),   # projected neighbour vals
                      pl.BlockSpec((C, H), lambda i: (0, 0)),             # W1 query rows (bf16)
                      pl.BlockSpec((Cka, H), lambda i: (0, 0)),           # W1 key+aux rows (bf16)
                      pl.BlockSpec((1, H), lambda i: (0, 0)),             # b1
                      pl.BlockSpec((1, H), lambda i: (0, 0))],            # w2 row
            out_specs=pl.BlockSpec((TS, Cout), lambda i: (i, 0))),
        compiler_params=pltpu.CompilerParams(
            dimension_semantics=("parallel",),
            vmem_limit_bytes=vmem_limit),
    )(q_feat, ka2, mask, vals, w1q, w1ka, b1.reshape(1, H), w2_row)
    return out[:S] if Sp != S else out


# ----------------------------------------------------------------------------
# Kernel 3: F.normalize(x)  (L2 along feature dim, eps=1e-12) via rsqrt
# ----------------------------------------------------------------------------
def _l2_normalize_kernel(x_ref, o_ref):
    x = x_ref[...]
    n2 = jnp.sum(x * x, axis=-1, keepdims=True)
    o_ref[...] = x * jax.lax.rsqrt(jnp.maximum(n2, jnp.float32(1e-24)))


def l2_normalize(x, max_tile=1024):
    S, C = x.shape
    tile, Sp = _choose_tile(S, max_tile)
    xp = jnp.pad(x, ((0, Sp - S), (0, 0))) if Sp != S else x
    out = pl.pallas_call(
        _l2_normalize_kernel,
        out_shape=jax.ShapeDtypeStruct((Sp, C), jnp.float32),
        grid_spec=pltpu.PrefetchScalarGridSpec(
            num_scalar_prefetch=0,
            grid=(Sp // tile,),
            in_specs=[pl.BlockSpec((tile, C), lambda i: (i, 0))],
            out_specs=pl.BlockSpec((tile, C), lambda i: (i, 0))),
        compiler_params=pltpu.CompilerParams(dimension_semantics=("parallel",)),
    )(xp)
    return out[:S] if Sp != S else out


# ----------------------------------------------------------------------------
# GraphAtt / GCN_Dense_Aux forward (glue: gathers, W1 split, scatter)
# ----------------------------------------------------------------------------
def graph_att_forward(params, word_vec, src_idx, neighs_idx, aux, src_mask):
    # TODO(synk): nn.Dropout(p=0.5) treated as identity (eval mode); training-time
    #             stochastic dropout is not reproduced.
    supports = word_vec
    C = supports.shape[-1]

    # Attention query/key come from the UN-projected supports (matches reference).
    q_feat = supports[src_idx]                                        # [S, C]
    key_feat = supports[neighs_idx]                                   # [S, K, C]
    # Single per-edge MXU operand: cat(key, aux), stored bf16 in HBM.
    key_aux = jnp.concatenate([key_feat, aux], axis=-1).astype(jnp.bfloat16)

    proj = linear_lrelu(supports,
                        params["w_proj"].astype(jnp.bfloat16),
                        params["b_proj"])                             # [N, Cout]
    vals = proj[neighs_idx]                                           # [S, K, Cout] (f32, VPU agg)

    # Split W1 [2C+4, H] into query / key+aux row blocks (bf16 for the MXU):
    #   cat(q, k, aux) @ W1 == q @ W1[:C] + cat(k, aux) @ W1[C:]
    w1 = params["w_a1"].astype(jnp.bfloat16)
    w1q, w1ka = w1[:C], w1[C:]
    w2_row = params["w_a2"].reshape(1, -1)                            # [1, H] (f32, VPU)
    # params["b_a2"] is intentionally unused: softmax is shift-invariant.

    agg = fused_attn_agg(q_feat, key_aux, src_mask, vals,
                         w1q, w1ka, params["b_a1"], w2_row)

    # supports[src_idx] = aggregated (src_idx distinct).  Inside jit XLA performs
    # this scatter in place since `proj` has no later use.
    return proj.at[src_idx].set(agg)


def gcn_dense_aux_forward(layer_params, word_vec, src_idx, neighs_idx, aux, src_mask):
    for p in layer_params:
        word_vec = graph_att_forward(p, word_vec, src_idx, neighs_idx, aux, src_mask)
    return l2_normalize(word_vec[src_idx])


# ----------------------------------------------------------------------------
# Deterministic parameter init (shapes from GraphAtt.__init__).
# proj_after / aux_attn / self.relu are defined but unused in forward -> skipped.
# ----------------------------------------------------------------------------
def init_graph_att_params(key, in_c, out_c, hidden=1024):
    ks = jax.random.split(key, 6)
    def u(k, shape, fan_in):
        bound = 1.0 / jnp.sqrt(jnp.float32(fan_in))
        return jax.random.uniform(k, shape, jnp.float32, -bound, bound)
    return {
        "w_proj": u(ks[0], (in_c, out_c), in_c),
        "b_proj": u(ks[1], (out_c,), in_c),
        "w_a1":   u(ks[2], (2 * in_c + 4, hidden), 2 * in_c + 4),
        "b_a1":   u(ks[3], (hidden,), 2 * in_c + 4),
        "w_a2":   u(ks[4], (hidden, 1), hidden),
        "b_a2":   u(ks[5], (1,), hidden),   # kept for shape parity; softmax shift-invariant
    }


if __name__ == "__main__":
    key = jax.random.PRNGKey(0)
    k_wv, k_ni, k_aux, k_mask, k_p1, k_p2 = jax.random.split(key, 6)

    N, C_IN, C_OUT = 16, 32, 32     # nodes, in_channels, out_channels
    S, K = 8, 8                     # sources, neighbours per source

    word_vec = jax.random.normal(k_wv, (N, C_IN), jnp.float32)
    src_idx = jnp.arange(S, dtype=jnp.int32)                               # distinct sources
    neighs_idx = jax.random.randint(k_ni, (S, K), 0, N, dtype=jnp.int32)
    aux = jax.random.normal(k_aux, (S, K, 4), jnp.float32)
    src_mask = (jax.random.uniform(k_mask, (S, K)) > 0.3).astype(jnp.float32)
    src_mask = src_mask.at[:, 0].set(1.0)                                  # >=1 valid neighbour/row

    layer_params = [
        init_graph_att_params(k_p1, C_IN, C_OUT),    # GraphAtt(in_channels, out_channels)
        init_graph_att_params(k_p2, C_OUT, C_OUT),   # GraphAtt(out_channels, out_channels)
    ]

    fwd = jax.jit(gcn_dense_aux_forward)
    out = fwd(layer_params, word_vec, src_idx, neighs_idx, aux, src_mask)
    out = jax.block_until_ready(out)
    assert out.shape == (S, C_OUT) and out.dtype == jnp.float32
    assert bool(jnp.all(jnp.isfinite(out)))
    print("KERNEL_OK")
</pallas_src>

<mosaic_0001>
module attributes {stable_mosaic.version = 11 : i64} {
  func.func @_linear_lrelu_kernel(%arg0: i32, %arg1: memref<8x32xf32, #tpu.memory_space<vmem>>, %arg2: memref<32x32xbf16, #tpu.memory_space<vmem>>, %arg3: memref<1x32xf32, #tpu.memory_space<vmem>>, %arg4: memref<8x32xf32, #tpu.memory_space<vmem>>) attributes {dimension_semantics = [#tpu.dimension_semantics<parallel>], iteration_bounds = array<i64: 2>, scalar_prefetch = 0 : i64, scratch_operands = 0 : i64, tpu.core_type = #tpu.core_type<tc>, window_params = [{transform_indices = @transform_0, window_bounds = array<i64: 8, 32>}, {pipeline_mode = #tpu.pipeline_mode<synchronous>, transform_indices = @transform_1, window_bounds = array<i64: 32, 32>}, {pipeline_mode = #tpu.pipeline_mode<synchronous>, transform_indices = @transform_2, window_bounds = array<i64: 1, 32>}, {transform_indices = @transform_3, window_bounds = array<i64: 8, 32>}]} {
    %c0 = arith.constant 0 : index
    %c0_0 = arith.constant 0 : index
    %0 = vector.load %arg1[%c0, %c0_0] : memref<8x32xf32, #tpu.memory_space<vmem>>, vector<8x32xf32>
    %1 = arith.truncf %0 : vector<8x32xf32> to vector<8x32xbf16>
    %c0_1 = arith.constant 0 : index
    %c0_2 = arith.constant 0 : index
    %2 = vector.load %arg2[%c0_1, %c0_2] : memref<32x32xbf16, #tpu.memory_space<vmem>>, vector<32x32xbf16>
    %cst = arith.constant dense<0.000000e+00> : vector<8x32xf32>
    %3 = tpu.matmul %1, %2, %cst {dimension_numbers = #tpu.dot_dimension_numbers<[1], [0], [0], [1], [0, 0, 1, 1], [], []>} : vector<8x32xbf16>, vector<32x32xbf16>, vector<8x32xf32> -> vector<8x32xf32>
    %c0_3 = arith.constant 0 : index
    %c0_4 = arith.constant 0 : index
    %4 = vector.load %arg3[%c0_3, %c0_4] : memref<1x32xf32, #tpu.memory_space<vmem>>, vector<1x32xf32>
    %5 = vector.broadcast %4 : vector<1x32xf32> to vector<8x32xf32>
    %6 = arith.addf %3, %5 : vector<8x32xf32>
    %cst_5 = arith.constant 2.000000e-01 : f32
    %7 = vector.broadcast %cst_5 : f32 to vector<8x32xf32>
    %8 = arith.mulf %7, %6 : vector<8x32xf32>
    %9 = arith.maximumf %6, %8 : vector<8x32xf32>
    %c0_6 = arith.constant 0 : index
    %c0_7 = arith.constant 0 : index
    %10 = vector.load %arg4[%c0_6, %c0_7] : memref<8x32xf32, #tpu.memory_space<vmem>>, vector<8x32xf32>
    tpu.vector_store %arg4[%c0_6, %c0_7], %9 {strides = array<i32>} : memref<8x32xf32, #tpu.memory_space<vmem>>, vector<8x32xf32>,
    return
  }
  func.func @transform_0(%arg0: i32) -> (i32, i32) {
    %c0_i32 = arith.constant 0 : i32
    %c0_i32_0 = arith.constant 0 : i32
    return %arg0, %c0_i32 : i32, i32
  }
  func.func @transform_1(%arg0: i32) -> (i32, i32) {
    %c0_i32 = arith.constant 0 : i32
    %c0_i32_0 = arith.constant 0 : i32
    %c0_i32_1 = arith.constant 0 : i32
    return %c0_i32, %c0_i32_0 : i32, i32
  }
  func.func @transform_2(%arg0: i32) -> (i32, i32) {
    %c0_i32 = arith.constant 0 : i32
    %c0_i32_0 = arith.constant 0 : i32
    %c0_i32_1 = arith.constant 0 : i32
    return %c0_i32, %c0_i32_0 : i32, i32
  }
  func.func @transform_3(%arg0: i32) -> (i32, i32) {
    %c0_i32 = arith.constant 0 : i32
    %c0_i32_0 = arith.constant 0 : i32
    return %arg0, %c0_i32 : i32, i32
  }
}

module attributes {stable_mosaic.version = 11 : i64} {
  func.func @_fused_attn_kernel(%arg0: i32, %arg1: memref<8x32xf32, #tpu.memory_space<vmem>>, %arg2: memref<64x36xbf16, #tpu.memory_space<vmem>>, %arg3: memref<8x8xf32, #tpu.memory_space<vmem>>, %arg4: memref<8x8x32xf32, #tpu.memory_space<vmem>>, %arg5: memref<32x1024xbf16, #tpu.memory_space<vmem>>, %arg6: memref<36x1024xbf16, #tpu.memory_space<vmem>>, %arg7: memref<1x1024xf32, #tpu.memory_space<vmem>>, %arg8: memref<1x1024xf32, #tpu.memory_space<vmem>>, %arg9: memref<8x32xf32, #tpu.memory_space<vmem>>) attributes {dimension_semantics = [#tpu.dimension_semantics<parallel>], iteration_bounds = array<i64: 1>, scalar_prefetch = 0 : i64, scratch_operands = 0 : i64, tpu.core_type = #tpu.core_type<tc>, window_params = [{transform_indices = @transform_0, window_bounds = array<i64: 8, 32>}, {transform_indices = @transform_1, window_bounds = array<i64: 64, 36>}, {transform_indices = @transform_2, window_bounds = array<i64: 8, 8>}, {transform_indices = @transform_3, window_bounds = array<i64: 8, 8, 32>}, {pipeline_mode = #tpu.pipeline_mode<synchronous>, transform_indices = @transform_4, window_bounds = array<i64: 32, 1024>}, {pipeline_mode = #tpu.pipeline_mode<synchronous>, transform_indices = @transform_5, window_bounds = array<i64: 36, 1024>}, {pipeline_mode = #tpu.pipeline_mode<synchronous>, transform_indices = @transform_6, window_bounds = array<i64: 1, 1024>}, {pipeline_mode = #tpu.pipeline_mode<synchronous>, transform_indices = @transform_7, window_bounds = array<i64: 1, 1024>}, {transform_indices = @transform_8, window_bounds = array<i64: 8, 32>}]} {
    %c0 = arith.constant 0 : index
    %c0_0 = arith.constant 0 : index
    %0 = vector.load %arg1[%c0, %c0_0] : memref<8x32xf32, #tpu.memory_space<vmem>>, vector<8x32xf32>
    %1 = arith.truncf %0 : vector<8x32xf32> to vector<8x32xbf16>
    %c0_1 = arith.constant 0 : index
    %c0_2 = arith.constant 0 : index
    %2 = vector.load %arg5[%c0_1, %c0_2] : memref<32x1024xbf16, #tpu.memory_space<vmem>>, vector<32x1024xbf16>
    %cst = arith.constant dense<0.000000e+00> : vector<8x1024xf32>
    %3 = tpu.matmul %1, %2, %cst {dimension_numbers = #tpu.dot_dimension_numbers<[1], [0], [0], [1], [0, 0, 1, 1], [], []>} : vector<8x32xbf16>, vector<32x1024xbf16>, vector<8x1024xf32> -> vector<8x1024xf32>
    %c0_3 = arith.constant 0 : index
    %c0_4 = arith.constant 0 : index
    %4 = vector.load %arg7[%c0_3, %c0_4] : memref<1x1024xf32, #tpu.memory_space<vmem>>, vector<1x1024xf32>
    %5 = vector.broadcast %4 : vector<1x1024xf32> to vector<8x1024xf32>
    %6 = arith.addf %3, %5 : vector<8x1024xf32>
    %c0_5 = arith.constant 0 : index
    %c0_6 = arith.constant 0 : index
    %7 = vector.load %arg2[%c0_5, %c0_6] : memref<64x36xbf16, #tpu.memory_space<vmem>>, vector<64x36xbf16>
    %c0_7 = arith.constant 0 : index
    %c0_8 = arith.constant 0 : index
    %8 = vector.load %arg6[%c0_7, %c0_8] : memref<36x1024xbf16, #tpu.memory_space<vmem>>, vector<36x1024xbf16>
    %cst_9 = arith.constant dense<0.000000e+00> : vector<64x1024xf32>
    %9 = tpu.matmul %7, %8, %cst_9 {dimension_numbers = #tpu.dot_dimension_numbers<[1], [0], [0], [1], [0, 0, 1, 1], [], []>} : vector<64x36xbf16>, vector<36x1024xbf16>, vector<64x1024xf32> -> vector<64x1024xf32>
    %10 = vector.shape_cast %9 : vector<64x1024xf32> to vector<8x8x1024xf32>
    %11 = vector.shape_cast %6 : vector<8x1024xf32> to vector<8x1x1024xf32>
    %12 = vector.broadcast %11 : vector<8x1x1024xf32> to vector<8x8x1024xf32>
    %13 = arith.addf %10, %12 : vector<8x8x1024xf32>
    %cst_10 = arith.constant 2.000000e-01 : f32
    %14 = vector.broadcast %cst_10 : f32 to vector<8x8x1024xf32>
    %15 = arith.mulf %14, %13 : vector<8x8x1024xf32>
    %16 = arith.maximumf %13, %15 : vector<8x8x1024xf32>
    %c0_11 = arith.constant 0 : index
    %c0_12 = arith.constant 0 : index
    %17 = vector.load %arg8[%c0_11, %c0_12] : memref<1x1024xf32, #tpu.memory_space<vmem>>, vector<1x1024xf32>
    %18 = vector.shape_cast %17 : vector<1x1024xf32> to vector<1x1x1024xf32>
    %19 = vector.broadcast %18 : vector<1x1x1024xf32> to vector<8x8x1024xf32>
    %20 = arith.mulf %16, %19 : vector<8x8x1024xf32>
    %cst_13 = arith.constant dense<0.000000e+00> : vector<8x8xf32>
    %21 = vector.multi_reduction <add>, %20, %cst_13 [2] : vector<8x8x1024xf32> to vector<8x8xf32>
    %c0_14 = arith.constant 0 : index
    %c0_15 = arith.constant 0 : index
    %22 = vector.load %arg3[%c0_14, %c0_15] : memref<8x8xf32, #tpu.memory_space<vmem>>, vector<8x8xf32>
    %cst_16 = arith.constant 5.000000e-01 : f32
    %23 = vector.broadcast %cst_16 : f32 to vector<8x8xf32>
    %24 = arith.cmpf ogt, %22, %23 : vector<8x8xf32>
    %cst_17 = arith.constant -1.000000e+06 : f32
    %25 = vector.broadcast %cst_17 : f32 to vector<8x8xf32>
    %26 = arith.select %24, %21, %25 : vector<8x8xi1>, vector<8x8xf32>
    %cst_18 = arith.constant dense<0xFF800000> : vector<8xf32>
    %27 = vector.multi_reduction <maximumf>, %26, %cst_18 [1] : vector<8x8xf32> to vector<8xf32>
    %28 = vector.shape_cast %27 : vector<8xf32> to vector<8x1xf32>
    %29 = vector.broadcast %28 : vector<8x1xf32> to vector<8x8xf32>
    %30 = arith.subf %26, %29 : vector<8x8xf32>
    %31 = math.exp %30 : vector<8x8xf32>
    %cst_19 = arith.constant dense<0.000000e+00> : vector<8xf32>
    %32 = vector.multi_reduction <add>, %31, %cst_19 [1] : vector<8x8xf32> to vector<8xf32>
    %33 = vector.shape_cast %32 : vector<8xf32> to vector<8x1xf32>
    %34 = vector.broadcast %33 : vector<8x1xf32> to vector<8x8xf32>
    %35 = arith.divf %31, %34 : vector<8x8xf32>
    %36 = vector.shape_cast %35 : vector<8x8xf32> to vector<8x8x1xf32>
    %c0_20 = arith.constant 0 : index
    %c0_21 = arith.constant 0 : index
    %c0_22 = arith.constant 0 : index
    %37 = vector.load %arg4[%c0_20, %c0_21, %c0_22] : memref<8x8x32xf32, #tpu.memory_space<vmem>>, vector<8x8x32xf32>
    %38 = vector.broadcast %36 : vector<8x8x1xf32> to vector<8x8x32xf32>
    %39 = arith.mulf %38, %37 : vector<8x8x32xf32>
    %cst_23 = arith.constant dense<0.000000e+00> : vector<8x32xf32>
    %40 = vector.multi_reduction <add>, %39, %cst_23 [1] : vector<8x8x32xf32> to vector<8x32xf32>
    %c0_24 = arith.constant 0 : index
    %c0_25 = arith.constant 0 : index
    %41 = vector.load %arg9[%c0_24, %c0_25] : memref<8x32xf32, #tpu.memory_space<vmem>>, vector<8x32xf32>
    tpu.vector_store %arg9[%c0_24, %c0_25], %40 {strides = array<i32>} : memref<8x32xf32, #tpu.memory_space<vmem>>, vector<8x32xf32>,
    return
  }
  func.func @transform_0(%arg0: i32) -> (i32, i32) {
    %c0_i32 = arith.constant 0 : i32
    %c0_i32_0 = arith.constant 0 : i32
    return %arg0, %c0_i32 : i32, i32
  }
  func.func @transform_1(%arg0: i32) -> (i32, i32) {
    %c0_i32 = arith.constant 0 : i32
    %c0_i32_0 = arith.constant 0 : i32
    return %arg0, %c0_i32 : i32, i32
  }
  func.func @transform_2(%arg0: i32) -> (i32, i32) {
    %c0_i32 = arith.constant 0 : i32
    %c0_i32_0 = arith.constant 0 : i32
    return %arg0, %c0_i32 : i32, i32
  }
  func.func @transform_3(%arg0: i32) -> (i32, i32, i32) {
    %c0_i32 = arith.constant 0 : i32
    %c0_i32_0 = arith.constant 0 : i32
    %c0_i32_1 = arith.constant 0 : i32
    return %arg0, %c0_i32, %c0_i32_0 : i32, i32, i32
  }
  func.func @transform_4(%arg0: i32) -> (i32, i32) {
    %c0_i32 = arith.constant 0 : i32
    %c0_i32_0 = arith.constant 0 : i32
    %c0_i32_1 = arith.constant 0 : i32
    return %c0_i32, %c0_i32_0 : i32, i32
  }
  func.func @transform_5(%arg0: i32) -> (i32, i32) {
    %c0_i32 = arith.constant 0 : i32
    %c0_i32_0 = arith.constant 0 : i32
    %c0_i32_1 = arith.constant 0 : i32
    return %c0_i32, %c0_i32_0 : i32, i32
  }
  func.func @transform_6(%arg0: i32) -> (i32, i32) {
    %c0_i32 = arith.constant 0 : i32
    %c0_i32_0 = arith.constant 0 : i32
    %c0_i32_1 = arith.constant 0 : i32
    return %c0_i32, %c0_i32_0 : i32, i32
  }
  func.func @transform_7(%arg0: i32) -> (i32, i32) {
    %c0_i32 = arith.constant 0 : i32
    %c0_i32_0 = arith.constant 0 : i32
    %c0_i32_1 = arith.constant 0 : i32
    return %c0_i32, %c0_i32_0 : i32, i32
  }
  func.func @transform_8(%arg0: i32) -> (i32, i32) {
    %c0_i32 = arith.constant 0 : i32
    %c0_i32_0 = arith.constant 0 : i32
    return %arg0, %c0_i32 : i32, i32
  }
}

module attributes {stable_mosaic.version = 11 : i64} {
  func.func @_l2_normalize_kernel(%arg0: i32, %arg1: memref<8x32xf32, #tpu.memory_space<vmem>>, %arg2: memref<8x32xf32, #tpu.memory_space<vmem>>) attributes {dimension_semantics = [#tpu.dimension_semantics<parallel>], iteration_bounds = array<i64: 1>, scalar_prefetch = 0 : i64, scratch_operands = 0 : i64, tpu.core_type = #tpu.core_type<tc>, window_params = [{transform_indices = @transform_0, window_bounds = array<i64: 8, 32>}, {transform_indices = @transform_1, window_bounds = array<i64: 8, 32>}]} {
    %c0 = arith.constant 0 : index
    %c0_0 = arith.constant 0 : index
    %0 = vector.load %arg1[%c0, %c0_0] : memref<8x32xf32, #tpu.memory_space<vmem>>, vector<8x32xf32>
    %1 = arith.mulf %0, %0 : vector<8x32xf32>
    %cst = arith.constant dense<0.000000e+00> : vector<8xf32>
    %2 = vector.multi_reduction <add>, %1, %cst [1] : vector<8x32xf32> to vector<8xf32>
    %3 = vector.shape_cast %2 : vector<8xf32> to vector<8x1xf32>
    %cst_1 = arith.constant 1.000000e-24 : f32
    %4 = vector.broadcast %cst_1 : f32 to vector<8x1xf32>
    %5 = arith.maximumf %3, %4 : vector<8x1xf32>
    %6 = math.rsqrt %5 : vector<8x1xf32>
    %7 = vector.broadcast %6 : vector<8x1xf32> to vector<8x32xf32>
    %8 = arith.mulf %0, %7 : vector<8x32xf32>
    %c0_2 = arith.constant 0 : index
    %c0_3 = arith.constant 0 : index
    %9 = vector.load %arg2[%c0_2, %c0_3] : memref<8x32xf32, #tpu.memory_space<vmem>>, vector<8x32xf32>
    tpu.vector_store %arg2[%c0_2, %c0_3], %8 {strides = array<i32>} : memref<8x32xf32, #tpu.memory_space<vmem>>, vector<8x32xf32>,
    return
  }
  func.func @transform_0(%arg0: i32) -> (i32, i32) {
    %c0_i32 = arith.constant 0 : i32
    %c0_i32_0 = arith.constant 0 : i32
    return %arg0, %c0_i32 : i32, i32
  }
  func.func @transform_1(%arg0: i32) -> (i32, i32) {
    %c0_i32 = arith.constant 0 : i32
    %c0_i32_0 = arith.constant 0 : i32
    return %arg0, %c0_i32 : i32, i32
  }
}

</mosaic_0001>

<llo_original>
// kernel: gcn_dense_aux_forward.9
$region0: #{gcn_dense_aux_forward.9}
  #allocation0 [shape = 'u32[]', space=smem, size = 0x4, offset = 0x4, fixed_abs, tag = 'smem constant byte address 0x4 - core index']
  #allocation1 [shape = 'u32[144,128]{1,0:T(1,128)}', space=vmem, size = 0x12000, scoped, tag = 'internal scratch']
  %s0 = inlined_call_operand.vmem [shape: f32[8,32], index: 0, kind: input, shape index: {}]
  %s1 = inlined_call_operand.hbm [shape: f32[8,32], index: 1, kind: output, shape index: {}]
  %s2 = sld [smem:[#allocation0]]
  $region14: #{gcn_dense_aux_forward.9} parent=0
    _
  %s4 = ssub.s32 1, %s2
  %s5 = scalar_select 0, %s4, %s2
  $region1: #{gcn_dense_aux_forward.9} parent=0
    #allocation2 [shape = 'u8[4096]{0}', space=vmem, size = 0x1000, scoped, tag = 'output window, operand 0, single buffered']
    #allocation3 [shape = 's32[1]{0}', space=sflag, size = 0x4, scoped, tag = 'scoped memory for gcn_dense_aux_forward.9']
    %6 = vsyncpa [#allocation3], 0
    // Predicated region
    $region2: #{gcn_dense_aux_forward.9} parent=1 // pred_check
      _
    $region3: #{gcn_dense_aux_forward.9} parent=1 // pred_check_branch
      %8 = sbr.rel (0) target = $region5
    $region4: #{gcn_dense_aux_forward.9} parent=1 // pred_region
      _
    $region5: #{gcn_dense_aux_forward.9} parent=1 // pred_fallthru
      _
    %v9 = vld [vmem:[%s0] sm:$0xff]
    %v10 = vmul.f32 %v9, %v9
    %vm11 = vcmask 261120
    %v12 = vsel %vm11, %v10, 0.0
    %13 = vadd.xlane.f32.xlu0 %v12
    %v14 = vpop.xlane.xlu0 %13
    %v15 = vmax.f32 %v14, 1e-24
    %v16 = vrsqrt.pop %v15
    %v17 = vmul.f32 %v9, %v16
    %18 = vst.msk [vmem:[#allocation2] sm:$0xff] %vm11, %v17
    // Predicated region
    $region6: #{gcn_dense_aux_forward.9} parent=1 // pred_check
      _
    $region7: #{gcn_dense_aux_forward.9} parent=1 // pred_check_branch
      %20 = sbr.rel (0) target = $region9
    $region8: #{gcn_dense_aux_forward.9} parent=1 // pred_region
      %s22 = ssub.s32 128, 128
      %23 = vsyncadd [#allocation3], %s22
      %s25 = sshll.u32 [#allocation2], 4
      %s26 = int_to_ptr.vmem [resolvable:$true] %s25
      %28 = dma.vmem_to_hbm [thread:$0]  %s26, 128, %s1, [#allocation3]
    $region9: #{gcn_dense_aux_forward.9} parent=1 // pred_fallthru
      _
    // Predicated region
    $region10: #{gcn_dense_aux_forward.9} parent=1 // pred_check
      _
    $region11: #{gcn_dense_aux_forward.9} parent=1 // pred_check_branch
      %30 = sbr.rel (0) target = $region13
    $region12: #{gcn_dense_aux_forward.9} parent=1 // pred_region
      %31 = dma.done [#allocation3], 128
    $region13: #{gcn_dense_aux_forward.9} parent=1 // pred_fallthru
      _
    %32 = vsyncpa [#allocation3], 1

// kernel: gcn_dense_aux_forward.5
$region0: #{gcn_dense_aux_forward.5}
  #allocation0 [shape = 'u32[]', space=smem, size = 0x4, offset = 0x4, fixed_abs, tag = 'smem constant byte address 0x4 - core index']
  #allocation1 [shape = 'u32[144,128]{1,0:T(1,128)}', space=vmem, size = 0x12000, scoped, tag = 'internal scratch']
  %s0 = inlined_call_operand.vmem [shape: f32[16,32], index: 0, kind: input, shape index: {}]
  %s1 = inlined_call_operand.vmem [shape: bf16[32,32], index: 1, kind: input, shape index: {}]
  %s2 = inlined_call_operand.vmem [shape: f32[1,32], index: 2, kind: input, shape index: {}]
  %s3 = inlined_call_operand.vmem [shape: f32[16,32], index: 3, kind: output, shape index: {}]
  %s4 = sld [smem:[#allocation0]]
  $region45: #{gcn_dense_aux_forward.5} parent=0
    _
  %s6 = ssub.s32 1, %s4
  %s7 = scalar_select 0, %s6, %s4
  loop: start=0, step=1, limit=4
  $region2: #{gcn_dense_aux_forward.5} parent=0 // loop_pre_header
    _
  $region3: #{gcn_dense_aux_forward.5} parent=0 // loop_header
    %s9 = sphi 0, %s13
    %p10 = scmp.ge.s32.totalorder %s9, 4
    %s19 = sphi 0, %s21
    %s22 = sphi 0, %s19
    %s23 = sphi 0, %s22
    %s39 = sphi 0, %s23
    %s43 = sphi 0, %s43
    %s45 = sphi 0, %s43
    %s46 = sphi 0, %s45
    %s60 = sphi 0, %s46
    %s64 = sphi 0, %s64
    %s66 = sphi 0, %s64
    %s67 = sphi 0, %s66
    %s81 = sphi 0, %s67
    %s87 = sphi 0, %s89
    %s90 = sphi 0, %s87
    %s91 = sphi 0, %s90
    %s107 = sphi 0, %s91
  $region4: #{gcn_dense_aux_forward.5} parent=0 // loop_header_branch
    %12 = sbr.rel (%p10) target = $region8
  $region5: #{gcn_dense_aux_forward.5} parent=0 // loop_body
    %s14 = ssub.s32 %s9, 1
    %s15 = ssub.s32 %s9, 2
    %s16 = sadd.s32 %s9, 1
    %s17 = ssub.s32 %s9, %s16
    %p18 = scmp.eq.s32.totalorder %s17, 0
    %s20 = sadd.s32 %s19, 1
    %s21 = scalar_select %p18, %s19, %s20
    %p24 = pneg %p18
    %p25 = scmp.eq.s32.totalorder %s9, 1
    %p26 = por %p24, %p25
    %p27 = scmp.ne.s32.totalorder %s19, %s22
    %p28 = scmp.eq.s32.totalorder %s9, 0
    %p29 = por %p27, %p28
    %p30 = scmp.ne.s32.totalorder %s19, %s22
    %p31 = scmp.eq.s32.totalorder %s14, 1
    %p32 = por %p30, %p31
    %p33 = scmp.ne.s32.totalorder %s22, %s23
    %p34 = scmp.eq.s32.totalorder %s14, 0
    %p35 = por %p33, %p34
    %p36 = scmp.ne.s32.totalorder %s22, %s23
    %p37 = scmp.eq.s32.totalorder %s15, 1
    %p38 = por %p36, %p37
    %p40 = scmp.ne.s32.totalorder %s23, %s39
    %p41 = scmp.eq.s32.totalorder %s15, 0
    %p42 = por %p40, %p41
    %s44 = sadd.s32 %s43, 1
    %p47 = scmp.eq.s32.totalorder %s9, 1
    %p48 = scmp.ne.s32.totalorder %s43, %s45
    %p49 = scmp.eq.s32.totalorder %s9, 0
    %p50 = por %p48, %p49
    %p51 = scmp.ne.s32.totalorder %s43, %s45
    %p52 = scmp.eq.s32.totalorder %s14, 1
    %p53 = por %p51, %p52
    %p54 = scmp.ne.s32.totalorder %s45, %s46
    %p55 = scmp.eq.s32.totalorder %s14, 0
    %p56 = por %p54, %p55
    %p57 = scmp.ne.s32.totalorder %s45, %s46
    %p58 = scmp.eq.s32.totalorder %s15, 1
    %p59 = por %p57, %p58
    %p61 = scmp.ne.s32.totalorder %s46, %s60
    %p62 = scmp.eq.s32.totalorder %s15, 0
    %p63 = por %p61, %p62
    %s65 = sadd.s32 %s64, 1
    %p68 = scmp.eq.s32.totalorder %s9, 1
    %p69 = scmp.ne.s32.totalorder %s64, %s66
    %p70 = scmp.eq.s32.totalorder %s9, 0
    %p71 = por %p69, %p70
    %p72 = scmp.ne.s32.totalorder %s64, %s66
    %p73 = scmp.eq.s32.totalorder %s14, 1
    %p74 = por %p72, %p73
    %p75 = scmp.ne.s32.totalorder %s66, %s67
    %p76 = scmp.eq.s32.totalorder %s14, 0
    %p77 = por %p75, %p76
    %p78 = scmp.ne.s32.totalorder %s66, %s67
    %p79 = scmp.eq.s32.totalorder %s15, 1
    %p80 = por %p78, %p79
    %p82 = scmp.ne.s32.totalorder %s67, %s81
    %p83 = scmp.eq.s32.totalorder %s15, 0
    %p84 = por %p82, %p83
    %s85 = ssub.s32 %s9, %s16
    %p86 = scmp.eq.s32.totalorder %s85, 0
    %s88 = sadd.s32 %s87, 1
    %s89 = scalar_select %p86, %s87, %s88
    %p92 = pneg %p86
    %p93 = scmp.eq.s32.totalorder %s9, 1
    %p94 = por %p92, %p93
    %p95 = scmp.ne.s32.totalorder %s87, %s90
    %p96 = scmp.eq.s32.totalorder %s9, 0
    %p97 = por %p95, %p96
    %p98 = scmp.ne.s32.totalorder %s87, %s90
    %p99 = scmp.eq.s32.totalorder %s14, 1
    %p100 = por %p98, %p99
    %p101 = scmp.ne.s32.totalorder %s90, %s91
    %p102 = scmp.eq.s32.totalorder %s14, 0
    %p103 = por %p101, %p102
    %p104 = scmp.ne.s32.totalorder %s90, %s91
    %p105 = scmp.eq.s32.totalorder %s15, 1
    %p106 = por %p104, %p105
    %p108 = scmp.ne.s32.totalorder %s91, %s107
    %p109 = scmp.eq.s32.totalorder %s15, 0
    %p110 = por %p108, %p109
    %p111 = scmp.le.s32.totalorder 1, %s9
    %p112 = scmp.lt.s32.totalorder %s9, 3
    %p113 = pnand %p111, %p112
    %p114 = pneg %p113
    // Predicated region
    $region9: #{gcn_dense_aux_forward.5} parent=5 // pred_check
      _
    $region10: #{gcn_dense_aux_forward.5} parent=5 // pred_check_branch
      %116 = sbr.rel (%p113) target = $region12
    $region11: #{gcn_dense_aux_forward.5} parent=5 // pred_region
      %s117 = ssub.s32 %s9, 1
      // Predicated region
      $region13: #{gcn_dense_aux_forward.5} parent=11 // pred_check
        %p118 = pneg %p56
      $region14: #{gcn_dense_aux_forward.5} parent=11 // pred_check_branch
        %120 = sbr.rel (%p118) target = $region16
      $region15: #{gcn_dense_aux_forward.5} parent=11 // pred_region
        _
      $region16: #{gcn_dense_aux_forward.5} parent=11 // pred_fallthru
        _
      // Predicated region
      $region17: #{gcn_dense_aux_forward.5} parent=11 // pred_check
        %p121 = pneg %p77
      $region18: #{gcn_dense_aux_forward.5} parent=11 // pred_check_branch
        %123 = sbr.rel (%p121) target = $region20
      $region19: #{gcn_dense_aux_forward.5} parent=11 // pred_region
        _
      $region20: #{gcn_dense_aux_forward.5} parent=11 // pred_fallthru
        _
    $region12: #{gcn_dense_aux_forward.5} parent=5 // pred_fallthru
      _
    %p124 = scmp.lt.s32.totalorder %s9, 2
    // Predicated region
    $region21: #{gcn_dense_aux_forward.5} parent=5 // pred_check
      %p125 = pneg %p124
    $region22: #{gcn_dense_aux_forward.5} parent=5 // pred_check_branch
      %127 = sbr.rel (%p125) target = $region24
    $region23: #{gcn_dense_aux_forward.5} parent=5 // pred_region
      // Predicated region
      $region25: #{gcn_dense_aux_forward.5} parent=23 // pred_check
        %p128 = pneg %p29
      $region26: #{gcn_dense_aux_forward.5} parent=23 // pred_check_branch
        %130 = sbr.rel (%p128) target = $region28
      $region27: #{gcn_dense_aux_forward.5} parent=23 // pred_region
        %p131 = scmp.lt.s32.totalorder %s9, 1
        %s132 = scalar_select %p131, %s9, 1
        %s133 = smul.addr %s132, 8
        %s134 = scalar_lea.vmem %s0, %s133
      $region28: #{gcn_dense_aux_forward.5} parent=23 // pred_fallthru
        _
    $region24: #{gcn_dense_aux_forward.5} parent=5 // pred_fallthru
      _
    %p135 = scmp.le.s32.totalorder 1, %s9
    %p136 = scmp.lt.s32.totalorder %s9, 3
    %p137 = pnand %p135, %p136
    %p138 = pneg %p137
    // Predicated region
    $region29: #{gcn_dense_aux_forward.5} parent=5 // pred_check
      _
    $region30: #{gcn_dense_aux_forward.5} parent=5 // pred_check_branch
      %140 = sbr.rel (%p137) target = $region32
    $region31: #{gcn_dense_aux_forward.5} parent=5 // pred_region
      %s141 = ssub.s32 %s9, 1
      %p142 = scmp.lt.s32.totalorder %s14, 1
      %s143 = scalar_select %p142, %s14, 1
      %s144 = smul.addr %s143, 8
      %s145 = scalar_lea.vmem %s0, %s144
      %p146 = pneg %p35
      %p147 = pneg %p32
      %p148 = pneg %p56
      %p149 = pneg %p53
      %p150 = pneg %p77
      %p151 = pneg %p74
      %p152 = pneg %p103
      %p153 = pneg %p100
      %p154 = scmp.lt.s32.totalorder %s14, 1
      %s155 = scalar_select %p154, %s14, 1
      %s156 = smul.addr %s155, 8
      %s157 = scalar_lea.vmem %s3, %s156
      %p158 = scmp.lt.s32.totalorder %s14, 1
      %s159 = scalar_select %p158, %s14, 1
      %s160 = smul.addr %s159, 8
      %s161 = scalar_lea.vmem %s0, %s160
      %p162 = scmp.lt.s32.totalorder %s14, 1
      %s163 = scalar_select %p162, %s14, 1
      %s164 = smul.addr %s163, 8
      %s165 = scalar_lea.vmem %s3, %s164
      %v167 = vld [vmem:[%s161] sm:$0xff]
      %v168 = vpack.c.bf16 %v167, %v167
      %v169 = vld [vmem:[%s1] sm:$0xf]
      %v170 = vld [vmem:[%s1 + $0x4] sm:$0xf]
      %v171 = vld [vmem:[%s1 + $0x8] sm:$0xf]
      %v172 = vld [vmem:[%s1 + $0xc] sm:$0xf]
      %v173 = vld [vmem:[%s2] sm:$0x1]
      %v175 = vlaneseq
      %v176 = vshrl.u32 %v175, 7
      %v177 = vsub.s32 0, %v176
      %v178 = vrot.slane %v173, %v177
      %v184 = vunpack.c.l.b16 %v169
      %v185 = vunpack.c.l.b16 %v170
      %v186 = vunpack.c.l.b16 %v171
      %v187 = vunpack.c.l.b16 %v172
      %v188 = vpack.c.b16 %v185, %v184
      %v189 = vpack.c.b16 %v187, %v186
      %vm192 = vcmask 261120
      %v194 = vsel %vm192, %v168, 0
      %196 = vmatprep.subr.bf16.mxu0 0
      %197 = vmatpush1.bf16.msra.mxu0 %v188
      %198 = vmatprep.subr.bf16.mxu0 0
      %199 = vmatpush1.bf16.msra.mxu0 %v189
      %200 = vmatprep.subr.bf16.mxu0 0
      %201 = vmatpush1.bf16.msra.mxu0 0
      %202 = vmatprep.subr.bf16.mxu0 0
      %203 = vmatpush1.bf16.msra.mxu0 0
      %204 = vmatprep.subr.bf16.mxu0 0
      %205 = vmatpush1.bf16.msra.mxu0 0
      %206 = vmatprep.subr.bf16.mxu0 0
      %207 = vmatpush1.bf16.msra.mxu0 0
      %208 = vmatprep.subr.bf16.mxu0 0
      %209 = vmatpush1.bf16.msra.mxu0 0
      %210 = vmatprep.subr.bf16.mxu0 0
      %211 = vmatpush1.bf16.msra.mxu0 0
      %212 = vmatprep.subr.bf16.mxu0 0
      %213 = vmatpush1.bf16.msra.mxu0 0
      %214 = vmatprep.subr.bf16.mxu0 0
      %215 = vmatpush1.bf16.msra.mxu0 0
      %216 = vmatprep.subr.bf16.mxu0 0
      %217 = vmatpush1.bf16.msra.mxu0 0
      %218 = vmatprep.subr.bf16.mxu0 0
      %219 = vmatpush1.bf16.msra.mxu0 0
      %220 = vmatprep.subr.bf16.mxu0 0
      %221 = vmatpush1.bf16.msra.mxu0 0
      %222 = vmatprep.subr.bf16.mxu0 0
      %223 = vmatpush1.bf16.msra.mxu0 0
      %224 = vmatprep.subr.bf16.mxu0 0
      %225 = vmatpush1.bf16.msra.mxu0 0
      %226 = vmatprep.subr.bf16.mxu0 0
      %227 = vmatpush1.bf16.msra.mxu0 0
      %228 = vmatprep.mubr.bf16.mxu0 0
      %229 = vmatmul.mubr.bf16.gmra.mrb[0].mxu0 %v194
      %v230 = vpop.f32.mrb[0].mxu0
      %v231 = vadd.f32 %v178, %v230
      %v232 = vpop.f32.mrb[0].mxu0
      %v233 = vpop.f32.mrb[0].mxu0
      %v234 = vpop.f32.mrb[0].mxu0
      %235 = vdwg.mxu0
      %v236 = vmul.f32 %v231, 0.2
      %v237 = vmax.f32 %v231, %v236
      %238 = vst.msk [vmem:[%s165] sm:$0xff] %vm192, %v237
      %p239 = scmp.lt.s32.totalorder %s14, 1
      %s240 = scalar_select %p239, %s14, 1
      %s241 = smul.addr %s240, 8
      %s242 = scalar_lea.vmem %s3, %s241
      // Predicated region
      $region33: #{gcn_dense_aux_forward.5} parent=31 // pred_check
        %p243 = pneg %p100
      $region34: #{gcn_dense_aux_forward.5} parent=31 // pred_check_branch
        %245 = sbr.rel (%p243) target = $region36
      $region35: #{gcn_dense_aux_forward.5} parent=31 // pred_region
        _
      $region36: #{gcn_dense_aux_forward.5} parent=31 // pred_fallthru
        _
    $region32: #{gcn_dense_aux_forward.5} parent=5 // pred_fallthru
      _
    %p246 = scmp.le.s32.totalorder 2, %s9
    // Predicated region
    $region37: #{gcn_dense_aux_forward.5} parent=5 // pred_check
      %p247 = pneg %p246
    $region38: #{gcn_dense_aux_forward.5} parent=5 // pred_check_branch
      %249 = sbr.rel (%p247) target = $region40
    $region39: #{gcn_dense_aux_forward.5} parent=5 // pred_region
      %s250 = ssub.s32 %s9, 2
      // Predicated region
      $region41: #{gcn_dense_aux_forward.5} parent=39 // pred_check
        %p251 = pneg %p106
      $region42: #{gcn_dense_aux_forward.5} parent=39 // pred_check_branch
        %253 = sbr.rel (%p251) target = $region44
      $region43: #{gcn_dense_aux_forward.5} parent=39 // pred_region
        %p254 = scmp.lt.s32.totalorder %s15, 1
        %s255 = scalar_select %p254, %s15, 1
        %s256 = smul.addr %s255, 8
        %s257 = scalar_lea.vmem %s3, %s256
      $region44: #{gcn_dense_aux_forward.5} parent=39 // pred_fallthru
        _
    $region40: #{gcn_dense_aux_forward.5} parent=5 // pred_fallthru
      _
  $region6: #{gcn_dense_aux_forward.5} parent=0 // loop_footer
    %s13 = sadd.s32 1, %s9
  $region7: #{gcn_dense_aux_forward.5} parent=0 // loop_footer_branch
    %8 = sbr.rel target = $region3
  $region8: #{gcn_dense_aux_forward.5} parent=0 // loop_exit
    _

// kernel: gcn_dense_aux_forward.6
$region0: #{gcn_dense_aux_forward.6}
  #allocation0 [shape = 'u32[]', space=smem, size = 0x4, offset = 0x4, fixed_abs, tag = 'smem constant byte address 0x4 - core index']
  #allocation1 [shape = 'u32[144,128]{1,0:T(1,128)}', space=vmem, size = 0x12000, scoped, tag = 'internal scratch']
  %s0 = inlined_call_operand.vmem [shape: f32[8,32], index: 0, kind: input, shape index: {}]
  %s1 = inlined_call_operand.vmem [shape: bf16[64,36], index: 1, kind: input, shape index: {}]
  %s2 = inlined_call_operand.vmem [shape: f32[8,8], index: 2, kind: input, shape index: {}]
  %s3 = inlined_call_operand.vmem [shape: f32[8,8,32], index: 3, kind: input, shape index: {}]
  %s4 = inlined_call_operand.vmem [shape: bf16[32,1024], index: 4, kind: input, shape index: {}]
  %s5 = inlined_call_operand.vmem [shape: bf16[36,1024], index: 5, kind: input, shape index: {}]
  %s6 = inlined_call_operand.vmem [shape: f32[1,1024], index: 6, kind: input, shape index: {}]
  %s7 = inlined_call_operand.vmem [shape: f32[1,1024], index: 7, kind: input, shape index: {}]
  %s8 = inlined_call_operand.vmem [shape: f32[8,32], index: 8, kind: output, shape index: {}]
  %s9 = sld [smem:[#allocation0]]
  $region42: #{gcn_dense_aux_forward.6} parent=0
    _
  %s11 = ssub.s32 1, %s9
  %s12 = scalar_select 0, %s11, %s9
  // Predicated region
  $region2: #{gcn_dense_aux_forward.6} parent=0 // pred_check
    _
  $region3: #{gcn_dense_aux_forward.6} parent=0 // pred_check_branch
    %14 = sbr.rel (0) target = $region5
  $region4: #{gcn_dense_aux_forward.6} parent=0 // pred_region
    _
  $region5: #{gcn_dense_aux_forward.6} parent=0 // pred_fallthru
    _
  // Predicated region
  $region6: #{gcn_dense_aux_forward.6} parent=0 // pred_check
    _
  $region7: #{gcn_dense_aux_forward.6} parent=0 // pred_check_branch
    %16 = sbr.rel (0) target = $region9
  $region8: #{gcn_dense_aux_forward.6} parent=0 // pred_region
    _
  $region9: #{gcn_dense_aux_forward.6} parent=0 // pred_fallthru
    _
  // Predicated region
  $region10: #{gcn_dense_aux_forward.6} parent=0 // pred_check
    _
  $region11: #{gcn_dense_aux_forward.6} parent=0 // pred_check_branch
    %18 = sbr.rel (0) target = $region13
  $region12: #{gcn_dense_aux_forward.6} parent=0 // pred_region
    _
  $region13: #{gcn_dense_aux_forward.6} parent=0 // pred_fallthru
    _
  // Predicated region
  $region14: #{gcn_dense_aux_forward.6} parent=0 // pred_check
    _
  $region15: #{gcn_dense_aux_forward.6} parent=0 // pred_check_branch
    %20 = sbr.rel (0) target = $region17
  $region16: #{gcn_dense_aux_forward.6} parent=0 // pred_region
    _
  $region17: #{gcn_dense_aux_forward.6} parent=0 // pred_fallthru
    _
  // Predicated region
  $region18: #{gcn_dense_aux_forward.6} parent=0 // pred_check
    _
  $region19: #{gcn_dense_aux_forward.6} parent=0 // pred_check_branch
    %22 = sbr.rel (0) target = $region21
  $region20: #{gcn_dense_aux_forward.6} parent=0 // pred_region
    _
  $region21: #{gcn_dense_aux_forward.6} parent=0 // pred_fallthru
    _
  // Predicated region
  $region22: #{gcn_dense_aux_forward.6} parent=0 // pred_check
    _
  $region23: #{gcn_dense_aux_forward.6} parent=0 // pred_check_branch
    %24 = sbr.rel (0) target = $region25
  $region24: #{gcn_dense_aux_forward.6} parent=0 // pred_region
    _
  $region25: #{gcn_dense_aux_forward.6} parent=0 // pred_fallthru
    _
  // Predicated region
  $region26: #{gcn_dense_aux_forward.6} parent=0 // pred_check
    _
  $region27: #{gcn_dense_aux_forward.6} parent=0 // pred_check_branch
    %26 = sbr.rel (0) target = $region29
  $region28: #{gcn_dense_aux_forward.6} parent=0 // pred_region
    _
  $region29: #{gcn_dense_aux_forward.6} parent=0 // pred_fallthru
    _
  // Predicated region
  $region30: #{gcn_dense_aux_forward.6} parent=0 // pred_check
    _
  $region31: #{gcn_dense_aux_forward.6} parent=0 // pred_check_branch
    %28 = sbr.rel (0) target = $region33
  $region32: #{gcn_dense_aux_forward.6} parent=0 // pred_region
    _
  $region33: #{gcn_dense_aux_forward.6} parent=0 // pred_fallthru
    _
  %v30 = vld [vmem:[%s0] sm:$0xff]
  %v31 = vpack.c.bf16 %v30, %v30
  %v32 = vld [vmem:[%s4] sm:$0xff]
  %v33 = vld [vmem:[%s4 + $0x8] sm:$0xff]
  %v34 = vld [vmem:[%s4 + $0x10] sm:$0xff]
  %v35 = vld [vmem:[%s4 + $0x18] sm:$0xff]
  %v36 = vld [vmem:[%s4 + $0x20] sm:$0xff]
  %v37 = vld [vmem:[%s4 + $0x28] sm:$0xff]
  %v38 = vld [vmem:[%s4 + $0x30] sm:$0xff]
  %v39 = vld [vmem:[%s4 + $0x38] sm:$0xff]
  %v40 = vld [vmem:[%s4 + $0x40] sm:$0xff]
  %v41 = vld [vmem:[%s4 + $0x48] sm:$0xff]
  %v42 = vld [vmem:[%s4 + $0x50] sm:$0xff]
  %v43 = vld [vmem:[%s4 + $0x58] sm:$0xff]
  %v44 = vld [vmem:[%s4 + $0x60] sm:$0xff]
  %v45 = vld [vmem:[%s4 + $0x68] sm:$0xff]
  %v46 = vld [vmem:[%s4 + $0x70] sm:$0xff]
  %v47 = vld [vmem:[%s4 + $0x78] sm:$0xff]
  %v48 = vld [vmem:[%s6] sm:$0xff]
  %v50 = vlaneseq
  %v51 = vshrl.u32 %v50, 7
  %v52 = vsub.s32 0, %v51
  %v53 = vrot.slane %v48, %v52
  %v54 = vlaneseq
  %v55 = vshrl.u32 %v54, 7
  %v56 = vsub.s32 1, %v55
  %v57 = vrot.slane %v48, %v56
  %v58 = vlaneseq
  %v59 = vshrl.u32 %v58, 7
  %v60 = vsub.s32 2, %v59
  %v61 = vrot.slane %v48, %v60
  %v62 = vlaneseq
  %v63 = vshrl.u32 %v62, 7
  %v64 = vsub.s32 3, %v63
  %v65 = vrot.slane %v48, %v64
  %v66 = vlaneseq
  %v67 = vshrl.u32 %v66, 7
  %v68 = vsub.s32 4, %v67
  %v69 = vrot.slane %v48, %v68
  %v70 = vlaneseq
  %v71 = vshrl.u32 %v70, 7
  %v72 = vsub.s32 5, %v71
  %v73 = vrot.slane %v48, %v72
  %v74 = vlaneseq
  %v75 = vshrl.u32 %v74, 7
  %v76 = vsub.s32 6, %v75
  %v77 = vrot.slane %v48, %v76
  %v78 = vlaneseq
  %v79 = vshrl.u32 %v78, 7
  %v80 = vsub.s32 7, %v79
  %v81 = vrot.slane %v48, %v80
  %v106 = vunpack.c.l.b16 %v32
  %v107 = vunpack.c.h.b16 %v32
  %v108 = vunpack.c.l.b16 %v33
  %v109 = vunpack.c.h.b16 %v33
  %v110 = vunpack.c.l.b16 %v34
  %v111 = vunpack.c.h.b16 %v34
  %v112 = vunpack.c.l.b16 %v35
  %v113 = vunpack.c.h.b16 %v35
  %v114 = vunpack.c.l.b16 %v36
  %v115 = vunpack.c.h.b16 %v36
  %v116 = vunpack.c.l.b16 %v37
  %v117 = vunpack.c.h.b16 %v37
  %v118 = vunpack.c.l.b16 %v38
  %v119 = vunpack.c.h.b16 %v38
  %v120 = vunpack.c.l.b16 %v39
  %v121 = vunpack.c.h.b16 %v39
  %v122 = vunpack.c.l.b16 %v40
  %v123 = vunpack.c.h.b16 %v40
  %v124 = vunpack.c.l.b16 %v41
  %v125 = vunpack.c.h.b16 %v41
  %v126 = vunpack.c.l.b16 %v42
  %v127 = vunpack.c.h.b16 %v42
  %v128 = vunpack.c.l.b16 %v43
  %v129 = vunpack.c.h.b16 %v43
  %v130 = vunpack.c.l.b16 %v44
  %v131 = vunpack.c.h.b16 %v44
  %v132 = vunpack.c.l.b16 %v45
  %v133 = vunpack.c.h.b16 %v45
  %v134 = vunpack.c.l.b16 %v46
  %v135 = vunpack.c.h.b16 %v46
  %v136 = vunpack.c.l.b16 %v47
  %v137 = vunpack.c.h.b16 %v47
  %v138 = vpack.c.b16 %v114, %v106
  %v139 = vpack.c.b16 %v115, %v107
  %v140 = vpack.c.b16 %v116, %v108
  %v141 = vpack.c.b16 %v117, %v109
  %v142 = vpack.c.b16 %v118, %v110
  %v143 = vpack.c.b16 %v119, %v111
  %v144 = vpack.c.b16 %v120, %v112
  %v145 = vpack.c.b16 %v121, %v113
  %v146 = vpack.c.b16 %v130, %v122
  %v147 = vpack.c.b16 %v131, %v123
  %v148 = vpack.c.b16 %v132, %v124
  %v149 = vpack.c.b16 %v133, %v125
  %v150 = vpack.c.b16 %v134, %v126
  %v151 = vpack.c.b16 %v135, %v127
  %v152 = vpack.c.b16 %v136, %v128
  %v153 = vpack.c.b16 %v137, %v129
  %vm170 = vcmask 261120
  %v172 = vsel %vm170, %v31, 0
  %174 = vmatprep.subr.bf16.mxu0 %v139
  %175 = vmatpush1.bf16.msra.mxu0 %v138
  %176 = vmatprep.subr.bf16.mxu0 %v147
  %177 = vmatpush1.bf16.msra.mxu0 %v146
  %178 = vmatprep.subr.bf16.mxu0 0
  %179 = vmatpush1.bf16.msra.mxu0 0
  %180 = vmatprep.subr.bf16.mxu0 0
  %181 = vmatpush1.bf16.msra.mxu0 0
  %182 = vmatprep.subr.bf16.mxu0 0
  %183 = vmatpush1.bf16.msra.mxu0 0
  %184 = vmatprep.subr.bf16.mxu0 0
  %185 = vmatpush1.bf16.msra.mxu0 0
  %186 = vmatprep.subr.bf16.mxu0 0
  %187 = vmatpush1.bf16.msra.mxu0 0
  %188 = vmatprep.subr.bf16.mxu0 0
  %189 = vmatpush1.bf16.msra.mxu0 0
  %190 = vmatprep.subr.bf16.mxu0 0
  %191 = vmatpush1.bf16.msra.mxu0 0
  %192 = vmatprep.subr.bf16.mxu0 0
  %193 = vmatpush1.bf16.msra.mxu0 0
  %194 = vmatprep.subr.bf16.mxu0 0
  %195 = vmatpush1.bf16.msra.mxu0 0
  %196 = vmatprep.subr.bf16.mxu0 0
  %197 = vmatpush1.bf16.msra.mxu0 0
  %198 = vmatprep.subr.bf16.mxu0 0
  %199 = vmatpush1.bf16.msra.mxu0 0
  %200 = vmatprep.subr.bf16.mxu0 0
  %201 = vmatpush1.bf16.msra.mxu0 0
  %202 = vmatprep.subr.bf16.mxu0 0
  %203 = vmatpush1.bf16.msra.mxu0 0
  %204 = vmatprep.subr.bf16.mxu0 0
  %205 = vmatpush1.bf16.msra.mxu0 0
  %206 = vmatprep.mubr.bf16.mxu0 0
  %207 = vmatmul.mubr.bf16.gmra.mrb[0].mxu0 %v172
  %v208 = vpop.f32.mrb[0].mxu0
  %v209 = vadd.f32 %v53, %v208
  %v210 = vpop.f32.mrb[0].mxu0
  %v211 = vadd.f32 %v57, %v210
  %v212 = vpop.f32.mrb[0].mxu0
  %v213 = vpop.f32.mrb[0].mxu0
  %214 = vdwg.mxu0
  %215 = vmatprep.subr.bf16.mxu0 %v141
  %216 = vmatpush1.bf16.msra.mxu0 %v140
  %217 = vmatprep.subr.bf16.mxu0 %v149
  %218 = vmatpush1.bf16.msra.mxu0 %v148
  %219 = vmatprep.subr.bf16.mxu0 0
  %220 = vmatpush1.bf16.msra.mxu0 0
  %221 = vmatprep.subr.bf16.mxu0 0
  %222 = vmatpush1.bf16.msra.mxu0 0
  %223 = vmatprep.subr.bf16.mxu0 0
  %224 = vmatpush1.bf16.msra.mxu0 0
  %225 = vmatprep.subr.bf16.mxu0 0
  %226 = vmatpush1.bf16.msra.mxu0 0
  %227 = vmatprep.subr.bf16.mxu0 0
  %228 = vmatpush1.bf16.msra.mxu0 0
  %229 = vmatprep.subr.bf16.mxu0 0
  %230 = vmatpush1.bf16.msra.mxu0 0
  %231 = vmatprep.subr.bf16.mxu0 0
  %232 = vmatpush1.bf16.msra.mxu0 0
  %233 = vmatprep.subr.bf16.mxu0 0
  %234 = vmatpush1.bf16.msra.mxu0 0
  %235 = vmatprep.subr.bf16.mxu0 0
  %236 = vmatpush1.bf16.msra.mxu0 0
  %237 = vmatprep.subr.bf16.mxu0 0
  %238 = vmatpush1.bf16.msra.mxu0 0
  %239 = vmatprep.subr.bf16.mxu0 0
  %240 = vmatpush1.bf16.msra.mxu0 0
  %241 = vmatprep.subr.bf16.mxu0 0
  %242 = vmatpush1.bf16.msra.mxu0 0
  %243 = vmatprep.subr.bf16.mxu0 0
  %244 = vmatpush1.bf16.msra.mxu0 0
  %245 = vmatprep.subr.bf16.mxu0 0
  %246 = vmatpush1.bf16.msra.mxu0 0
  %247 = vmatprep.mubr.bf16.mxu0 0
  %248 = vmatmul.mubr.bf16.gmra.mrb[0].mxu0 %v172
  %v249 = vpop.f32.mrb[0].mxu0
  %v250 = vadd.f32 %v61, %v249
  %v251 = vpop.f32.mrb[0].mxu0
  %v252 = vadd.f32 %v65, %v251
  %v253 = vpop.f32.mrb[0].mxu0
  %v254 = vpop.f32.mrb[0].mxu0
  %255 = vdwg.mxu0
  %256 = vmatprep.subr.bf16.mxu0 %v143
  %257 = vmatpush1.bf16.msra.mxu0 %v142
  %258 = vmatprep.subr.bf16.mxu0 %v151
  %259 = vmatpush1.bf16.msra.mxu0 %v150
  %260 = vmatprep.subr.bf16.mxu0 0
  %261 = vmatpush1.bf16.msra.mxu0 0
  %262 = vmatprep.subr.bf16.mxu0 0
  %263 = vmatpush1.bf16.msra.mxu0 0
  %264 = vmatprep.subr.bf16.mxu0 0
  %265 = vmatpush1.bf16.msra.mxu0 0
  %266 = vmatprep.subr.bf16.mxu0 0
  %267 = vmatpush1.bf16.msra.mxu0 0
  %268 = vmatprep.subr.bf16.mxu0 0
  %269 = vmatpush1.bf16.msra.mxu0 0
  %270 = vmatprep.subr.bf16.mxu0 0
  %271 = vmatpush1.bf16.msra.mxu0 0
  %272 = vmatprep.subr.bf16.mxu0 0
  %273 = vmatpush1.bf16.msra.mxu0 0
  %274 = vmatprep.subr.bf16.mxu0 0
  %275 = vmatpush1.bf16.msra.mxu0 0
  %276 = vmatprep.subr.bf16.mxu0 0
  %277 = vmatpush1.bf16.msra.mxu0 0
  %278 = vmatprep.subr.bf16.mxu0 0
  %279 = vmatpush1.bf16.msra.mxu0 0
  %280 = vmatprep.subr.bf16.mxu0 0
  %281 = vmatpush1.bf16.msra.mxu0 0
  %282 = vmatprep.subr.bf16.mxu0 0
  %283 = vmatpush1.bf16.msra.mxu0 0
  %284 = vmatprep.subr.bf16.mxu0 0
  %285 = vmatpush1.bf16.msra.mxu0 0
  %286 = vmatprep.subr.bf16.mxu0 0
  %287 = vmatpush1.bf16.msra.mxu0 0
  %288 = vmatprep.mubr.bf16.mxu0 0
  %289 = vmatmul.mubr.bf16.gmra.mrb[0].mxu0 %v172
  %v290 = vpop.f32.mrb[0].mxu0
  %v291 = vadd.f32 %v69, %v290
  %v292 = vpop.f32.mrb[0].mxu0
  %v293 = vadd.f32 %v73, %v292
  %v294 = vpop.f32.mrb[0].mxu0
  %v295 = vpop.f32.mrb[0].mxu0
  %296 = vdwg.mxu0
  %297 = vmatprep.subr.bf16.mxu0 %v145
  %298 = vmatpush1.bf16.msra.mxu0 %v144
  %299 = vmatprep.subr.bf16.mxu0 %v153
  %300 = vmatpush1.bf16.msra.mxu0 %v152
  %301 = vmatprep.subr.bf16.mxu0 0
  %302 = vmatpush1.bf16.msra.mxu0 0
  %303 = vmatprep.subr.bf16.mxu0 0
  %304 = vmatpush1.bf16.msra.mxu0 0
  %305 = vmatprep.subr.bf16.mxu0 0
  %306 = vmatpush1.bf16.msra.mxu0 0
  %307 = vmatprep.subr.bf16.mxu0 0
  %308 = vmatpush1.bf16.msra.mxu0 0
  %309 = vmatprep.subr.bf16.mxu0 0
  %310 = vmatpush1.bf16.msra.mxu0 0
  %311 = vmatprep.subr.bf16.mxu0 0
  %312 = vmatpush1.bf16.msra.mxu0 0
  %313 = vmatprep.subr.bf16.mxu0 0
  %314 = vmatpush1.bf16.msra.mxu0 0
  %315 = vmatprep.subr.bf16.mxu0 0
  %316 = vmatpush1.bf16.msra.mxu0 0
  %317 = vmatprep.subr.bf16.mxu0 0
  %318 = vmatpush1.bf16.msra.mxu0 0
  %319 = vmatprep.subr.bf16.mxu0 0
  %320 = vmatpush1.bf16.msra.mxu0 0
  %321 = vmatprep.subr.bf16.mxu0 0
  %322 = vmatpush1.bf16.msra.mxu0 0
  %323 = vmatprep.subr.bf16.mxu0 0
  %324 = vmatpush1.bf16.msra.mxu0 0
  %325 = vmatprep.subr.bf16.mxu0 0
  %326 = vmatpush1.bf16.msra.mxu0 0
  %327 = vmatprep.subr.bf16.mxu0 0
  %328 = vmatpush1.bf16.msra.mxu0 0
  %329 = vmatprep.mubr.bf16.mxu0 0
  %330 = vmatmul.mubr.bf16.gmra.mrb[0].mxu0 %v172
  %v331 = vpop.f32.mrb[0].mxu0
  %v332 = vadd.f32 %v77, %v331
  %v333 = vpop.f32.mrb[0].mxu0
  %v334 = vadd.f32 %v81, %v333
  %v335 = vpop.f32.mrb[0].mxu0
  %v336 = vpop.f32.mrb[0].mxu0
  %337 = vdwg.mxu0
  %v338 = vld [vmem:[%s1] sm:$0xf]
  %v339 = vld [vmem:[%s1 + $0x4] sm:$0xf]
  %v340 = vld [vmem:[%s1 + $0x8] sm:$0xf]
  %v341 = vld [vmem:[%s1 + $0xc] sm:$0xf]
  %v342 = vld [vmem:[%s1 + $0x10] sm:$0xf]
  %v343 = vld [vmem:[%s1 + $0x14] sm:$0xf]
  %v344 = vld [vmem:[%s1 + $0x18] sm:$0xf]
  %v345 = vld [vmem:[%s1 + $0x1c] sm:$0xf]
  %v346 = vld [vmem:[%s5] sm:$0xff]
  %v347 = vld [vmem:[%s5 + $0x8] sm:$0xff]
  %v348 = vld [vmem:[%s5 + $0x10] sm:$0xff]
  %v349 = vld [vmem:[%s5 + $0x18] sm:$0xff]
  %v350 = vld [vmem:[%s5 + $0x20] sm:$0xff]
  %v351 = vld [vmem:[%s5 + $0x28] sm:$0xff]
  %v352 = vld [vmem:[%s5 + $0x30] sm:$0xff]
  %v353 = vld [vmem:[%s5 + $0x38] sm:$0xff]
  %v354 = vld [vmem:[%s5 + $0x40] sm:$0xff]
  %v355 = vld [vmem:[%s5 + $0x48] sm:$0xff]
  %v356 = vld [vmem:[%s5 + $0x50] sm:$0xff]
  %v357 = vld [vmem:[%s5 + $0x58] sm:$0xff]
  %v358 = vld [vmem:[%s5 + $0x60] sm:$0xff]
  %v359 = vld [vmem:[%s5 + $0x68] sm:$0xff]
  %v360 = vld [vmem:[%s5 + $0x70] sm:$0xff]
  %v361 = vld [vmem:[%s5 + $0x78] sm:$0xff]
  %v362 = vld [vmem:[%s5 + $0x80] sm:$0x33]
  %v363 = vld [vmem:[%s5 + $0x88] sm:$0x33]
  %v364 = vld [vmem:[%s5 + $0x90] sm:$0x33]
  %v365 = vld [vmem:[%s5 + $0x98] sm:$0x33]
  %v374 = vunpack.c.l.b16 %v338
  %v375 = vunpack.c.l.b16 %v339
  %v376 = vunpack.c.l.b16 %v340
  %v377 = vunpack.c.l.b16 %v341
  %v378 = vunpack.c.l.b16 %v342
  %v379 = vunpack.c.l.b16 %v343
  %v380 = vunpack.c.l.b16 %v344
  %v381 = vunpack.c.l.b16 %v345
  %v382 = vpack.c.b16 %v375, %v374
  %v383 = vpack.c.b16 %v377, %v376
  %v384 = vpack.c.b16 %v379, %v378
  %v385 = vpack.c.b16 %v381, %v380
  %v406 = vunpack.c.l.b16 %v346
  %v407 = vunpack.c.h.b16 %v346
  %v408 = vunpack.c.l.b16 %v347
  %v409 = vunpack.c.h.b16 %v347
  %v410 = vunpack.c.l.b16 %v348
  %v411 = vunpack.c.h.b16 %v348
  %v412 = vunpack.c.l.b16 %v349
  %v413 = vunpack.c.h.b16 %v349
  %v414 = vunpack.c.l.b16 %v350
  %v415 = vunpack.c.h.b16 %v350
  %v416 = vunpack.c.l.b16 %v351
  %v417 = vunpack.c.h.b16 %v351
  %v418 = vunpack.c.l.b16 %v352
  %v419 = vunpack.c.h.b16 %v352
  %v420 = vunpack.c.l.b16 %v353
  %v421 = vunpack.c.h.b16 %v353
  %v422 = vunpack.c.l.b16 %v354
  %v423 = vunpack.c.h.b16 %v354
  %v424 = vunpack.c.l.b16 %v355
  %v425 = vunpack.c.h.b16 %v355
  %v426 = vunpack.c.l.b16 %v356
  %v427 = vunpack.c.h.b16 %v356
  %v428 = vunpack.c.l.b16 %v357
  %v429 = vunpack.c.h.b16 %v357
  %v430 = vunpack.c.l.b16 %v358
  %v431 = vunpack.c.h.b16 %v358
  %v432 = vunpack.c.l.b16 %v359
  %v433 = vunpack.c.h.b16 %v359
  %v434 = vunpack.c.l.b16 %v360
  %v435 = vunpack.c.h.b16 %v360
  %v436 = vunpack.c.l.b16 %v361
  %v437 = vunpack.c.h.b16 %v361
  %v438 = vunpack.c.l.b16 %v362
  %v439 = vunpack.c.h.b16 %v362
  %v440 = vunpack.c.l.b16 %v363
  %v441 = vunpack.c.h.b16 %v363
  %v442 = vunpack.c.l.b16 %v364
  %v443 = vunpack.c.h.b16 %v364
  %v444 = vunpack.c.l.b16 %v365
  %v445 = vunpack.c.h.b16 %v365
  %v446 = vpack.c.b16 %v414, %v406
  %v447 = vpack.c.b16 %v415, %v407
  %v448 = vpack.c.b16 %v416, %v408
  %v449 = vpack.c.b16 %v417, %v409
  %v450 = vpack.c.b16 %v418, %v410
  %v451 = vpack.c.b16 %v419, %v411
  %v452 = vpack.c.b16 %v420, %v412
  %v453 = vpack.c.b16 %v421, %v413
  %v454 = vpack.c.b16 %v430, %v422
  %v455 = vpack.c.b16 %v431, %v423
  %v456 = vpack.c.b16 %v432, %v424
  %v457 = vpack.c.b16 %v433, %v425
  %v458 = vpack.c.b16 %v434, %v426
  %v459 = vpack.c.b16 %v435, %v427
  %v460 = vpack.c.b16 %v436, %v428
  %v461 = vpack.c.b16 %v437, %v429
  %v462 = vpack.c.b16 %v438, %v438
  %v463 = vpack.c.b16 %v439, %v439
  %v464 = vpack.c.b16 %v440, %v440
  %v465 = vpack.c.b16 %v441, %v441
  %v466 = vpack.c.b16 %v442, %v442
  %v467 = vpack.c.b16 %v443, %v443
  %v468 = vpack.c.b16 %v444, %v444
  %v469 = vpack.c.b16 %v445, %v445
  %vm486 = vcmask 293888
  %v488 = vsel %vm486, %v382, 0
  %v491 = vsel %vm486, %v383, 0
  %v494 = vsel %vm486, %v384, 0
  %v497 = vsel %vm486, %v385, 0
  %vm499 = vcmask 1041408
  %v501 = vsel %vm499, %v462, 0
  %v504 = vsel %vm499, %v463, 0
  %v507 = vsel %vm499, %v464, 0
  %v510 = vsel %vm499, %v465, 0
  %v513 = vsel %vm499, %v466, 0
  %v516 = vsel %vm499, %v467, 0
  %v519 = vsel %vm499, %v468, 0
  %v522 = vsel %vm499, %v469, 0
  %524 = vmatprep.subr.bf16.mxu0 %v447
  %525 = vmatpush1.bf16.msra.mxu0 %v446
  %526 = vmatprep.subr.bf16.mxu0 %v455
  %527 = vmatpush1.bf16.msra.mxu0 %v454
  %528 = vmatprep.subr.bf16.mxu0 %v504
  %529 = vmatpush1.bf16.msra.mxu0 %v501
  %530 = vmatprep.subr.bf16.mxu0 0
  %531 = vmatpush1.bf16.msra.mxu0 0
  %532 = vmatprep.subr.bf16.mxu0 0
  %533 = vmatpush1.bf16.msra.mxu0 0
  %534 = vmatprep.subr.bf16.mxu0 0
  %535 = vmatpush1.bf16.msra.mxu0 0
  %536 = vmatprep.subr.bf16.mxu0 0
  %537 = vmatpush1.bf16.msra.mxu0 0
  %538 = vmatprep.subr.bf16.mxu0 0
  %539 = vmatpush1.bf16.msra.mxu0 0
  %540 = vmatprep.subr.bf16.mxu0 0
  %541 = vmatpush1.bf16.msra.mxu0 0
  %542 = vmatprep.subr.bf16.mxu0 0
  %543 = vmatpush1.bf16.msra.mxu0 0
  %544 = vmatprep.subr.bf16.mxu0 0
  %545 = vmatpush1.bf16.msra.mxu0 0
  %546 = vmatprep.subr.bf16.mxu0 0
  %547 = vmatpush1.bf16.msra.mxu0 0
  %548 = vmatprep.subr.bf16.mxu0 0
  %549 = vmatpush1.bf16.msra.mxu0 0
  %550 = vmatprep.subr.bf16.mxu0 0
  %551 = vmatpush1.bf16.msra.mxu0 0
  %552 = vmatprep.subr.bf16.mxu0 0
  %553 = vmatpush1.bf16.msra.mxu0 0
  %554 = vmatprep.subr.bf16.mxu0 0
  %555 = vmatpush1.bf16.msra.mxu0 0
  %556 = vmatprep.mubr.bf16.mxu0 0
  %557 = vmatmul.mubr.bf16.gmra.mrb[0].mxu0 %v488
  %v558 = vpop.f32.mrb[0].mxu0
  %v559 = vadd.f32 0.0, %v558
  %v560 = vpop.f32.mrb[0].mxu0
  %v561 = vadd.f32 0.0, %v560
  %v562 = vpop.f32.mrb[0].mxu0
  %v563 = vadd.f32 0.0, %v562
  %v564 = vpop.f32.mrb[0].mxu0
  %v565 = vadd.f32 0.0, %v564
  %566 = vmatprep.mubr.bf16.mxu0 0
  %567 = vmatmul.mubr.bf16.gmra.mrb[0].mxu0 %v491
  %v568 = vpop.f32.mrb[0].mxu0
  %v569 = vadd.f32 0.0, %v568
  %v570 = vpop.f32.mrb[0].mxu0
  %v571 = vadd.f32 0.0, %v570
  %v572 = vpop.f32.mrb[0].mxu0
  %v573 = vadd.f32 0.0, %v572
  %v574 = vpop.f32.mrb[0].mxu0
  %v575 = vadd.f32 0.0, %v574
  %576 = vmatprep.mubr.bf16.mxu0 0
  %577 = vmatmul.mubr.bf16.gmra.mrb[0].mxu0 %v494
  %v578 = vpop.f32.mrb[0].mxu0
  %v579 = vadd.f32 0.0, %v578
  %v580 = vpop.f32.mrb[0].mxu0
  %v581 = vadd.f32 0.0, %v580
  %v582 = vpop.f32.mrb[0].mxu0
  %v583 = vadd.f32 0.0, %v582
  %v584 = vpop.f32.mrb[0].mxu0
  %v585 = vadd.f32 0.0, %v584
  %586 = vmatprep.mubr.bf16.mxu0 0
  %587 = vmatmul.mubr.bf16.gmra.mrb[0].mxu0 %v497
  %v588 = vpop.f32.mrb[0].mxu0
  %v589 = vadd.f32 0.0, %v588
  %v590 = vpop.f32.mrb[0].mxu0
  %v591 = vadd.f32 0.0, %v590
  %v592 = vpop.f32.mrb[0].mxu0
  %v593 = vadd.f32 0.0, %v592
  %v594 = vpop.f32.mrb[0].mxu0
  %v595 = vadd.f32 0.0, %v594
  %596 = vdwg.mxu0
  %597 = vmatprep.subr.bf16.mxu0 %v449
  %598 = vmatpush1.bf16.msra.mxu0 %v448
  %599 = vmatprep.subr.bf16.mxu0 %v457
  %600 = vmatpush1.bf16.msra.mxu0 %v456
  %601 = vmatprep.subr.bf16.mxu0 %v510
  %602 = vmatpush1.bf16.msra.mxu0 %v507
  %603 = vmatprep.subr.bf16.mxu0 0
  %604 = vmatpush1.bf16.msra.mxu0 0
  %605 = vmatprep.subr.bf16.mxu0 0
  %606 = vmatpush1.bf16.msra.mxu0 0
  %607 = vmatprep.subr.bf16.mxu0 0
  %608 = vmatpush1.bf16.msra.mxu0 0
  %609 = vmatprep.subr.bf16.mxu0 0
  %610 = vmatpush1.bf16.msra.mxu0 0
  %611 = vmatprep.subr.bf16.mxu0 0
  %612 = vmatpush1.bf16.msra.mxu0 0
  %613 = vmatprep.subr.bf16.mxu0 0
  %614 = vmatpush1.bf16.msra.mxu0 0
  %615 = vmatprep.subr.bf16.mxu0 0
  %616 = vmatpush1.bf16.msra.mxu0 0
  %617 = vmatprep.subr.bf16.mxu0 0
  %618 = vmatpush1.bf16.msra.mxu0 0
  %619 = vmatprep.subr.bf16.mxu0 0
  %620 = vmatpush1.bf16.msra.mxu0 0
  %621 = vmatprep.subr.bf16.mxu0 0
  %622 = vmatpush1.bf16.msra.mxu0 0
  %623 = vmatprep.subr.bf16.mxu0 0
  %624 = vmatpush1.bf16.msra.mxu0 0
  %625 = vmatprep.subr.bf16.mxu0 0
  %626 = vmatpush1.bf16.msra.mxu0 0
  %627 = vmatprep.subr.bf16.mxu0 0
  %628 = vmatpush1.bf16.msra.mxu0 0
  %629 = vmatprep.mubr.bf16.mxu0 0
  %630 = vmatmul.mubr.bf16.gmra.mrb[0].mxu0 %v488
  %v631 = vpop.f32.mrb[0].mxu0
  %v632 = vadd.f32 0.0, %v631
  %v633 = vpop.f32.mrb[0].mxu0
  %v634 = vadd.f32 0.0, %v633
  %v635 = vpop.f32.mrb[0].mxu0
  %v636 = vadd.f32 0.0, %v635
  %v637 = vpop.f32.mrb[0].mxu0
  %v638 = vadd.f32 0.0, %v637
  %639 = vmatprep.mubr.bf16.mxu0 0
  %640 = vmatmul.mubr.bf16.gmra.mrb[0].mxu0 %v491
  %v641 = vpop.f32.mrb[0].mxu0
  %v642 = vadd.f32 0.0, %v641
  %v643 = vpop.f32.mrb[0].mxu0
  %v644 = vadd.f32 0.0, %v643
  %v645 = vpop.f32.mrb[0].mxu0
  %v646 = vadd.f32 0.0, %v645
  %v647 = vpop.f32.mrb[0].mxu0
  %v648 = vadd.f32 0.0, %v647
  %649 = vmatprep.mubr.bf16.mxu0 0
  %650 = vmatmul.mubr.bf16.gmra.mrb[0].mxu0 %v494
  %v651 = vpop.f32.mrb[0].mxu0
  %v652 = vadd.f32 0.0, %v651
  %v653 = vpop.f32.mrb[0].mxu0
  %v654 = vadd.f32 0.0, %v653
  %v655 = vpop.f32.mrb[0].mxu0
  %v656 = vadd.f32 0.0, %v655
  %v657 = vpop.f32.mrb[0].mxu0
  %v658 = vadd.f32 0.0, %v657
  %659 = vmatprep.mubr.bf16.mxu0 0
  %660 = vmatmul.mubr.bf16.gmra.mrb[0].mxu0 %v497
  %v661 = vpop.f32.mrb[0].mxu0
  %v662 = vadd.f32 0.0, %v661
  %v663 = vpop.f32.mrb[0].mxu0
  %v664 = vadd.f32 0.0, %v663
  %v665 = vpop.f32.mrb[0].mxu0
  %v666 = vadd.f32 0.0, %v665
  %v667 = vpop.f32.mrb[0].mxu0
  %v668 = vadd.f32 0.0, %v667
  %669 = vdwg.mxu0
  %670 = vmatprep.subr.bf16.mxu0 %v451
  %671 = vmatpush1.bf16.msra.mxu0 %v450
  %672 = vmatprep.subr.bf16.mxu0 %v459
  %673 = vmatpush1.bf16.msra.mxu0 %v458
  %674 = vmatprep.subr.bf16.mxu0 %v516
  %675 = vmatpush1.bf16.msra.mxu0 %v513
  %676 = vmatprep.subr.bf16.mxu0 0
  %677 = vmatpush1.bf16.msra.mxu0 0
  %678 = vmatprep.subr.bf16.mxu0 0
  %679 = vmatpush1.bf16.msra.mxu0 0
  %680 = vmatprep.subr.bf16.mxu0 0
  %681 = vmatpush1.bf16.msra.mxu0 0
  %682 = vmatprep.subr.bf16.mxu0 0
  %683 = vmatpush1.bf16.msra.mxu0 0
  %684 = vmatprep.subr.bf16.mxu0 0
  %685 = vmatpush1.bf16.msra.mxu0 0
  %686 = vmatprep.subr.bf16.mxu0 0
  %687 = vmatpush1.bf16.msra.mxu0 0
  %688 = vmatprep.subr.bf16.mxu0 0
  %689 = vmatpush1.bf16.msra.mxu0 0
  %690 = vmatprep.subr.bf16.mxu0 0
  %691 = vmatpush1.bf16.msra.mxu0 0
  %692 = vmatprep.subr.bf16.mxu0 0
  %693 = vmatpush1.bf16.msra.mxu0 0
  %694 = vmatprep.subr.bf16.mxu0 0
  %695 = vmatpush1.bf16.msra.mxu0 0
  %696 = vmatprep.subr.bf16.mxu0 0
  %697 = vmatpush1.bf16.msra.mxu0 0
  %698 = vmatprep.subr.bf16.mxu0 0
  %699 = vmatpush1.bf16.msra.mxu0 0
  %700 = vmatprep.subr.bf16.mxu0 0
  %701 = vmatpush1.bf16.msra.mxu0 0
  %702 = vmatprep.mubr.bf16.mxu0 0
  %703 = vmatmul.mubr.bf16.gmra.mrb[0].mxu0 %v488
  %v704 = vpop.f32.mrb[0].mxu0
  %v705 = vadd.f32 0.0, %v704
  %v706 = vpop.f32.mrb[0].mxu0
  %v707 = vadd.f32 0.0, %v706
  %v708 = vpop.f32.mrb[0].mxu0
  %v709 = vadd.f32 0.0, %v708
  %v710 = vpop.f32.mrb[0].mxu0
  %v711 = vadd.f32 0.0, %v710
  %712 = vmatprep.mubr.bf16.mxu0 0
  %713 = vmatmul.mubr.bf16.gmra.mrb[0].mxu0 %v491
  %v714 = vpop.f32.mrb[0].mxu0
  %v715 = vadd.f32 0.0, %v714
  %v716 = vpop.f32.mrb[0].mxu0
  %v717 = vadd.f32 0.0, %v716
  %v718 = vpop.f32.mrb[0].mxu0
  %v719 = vadd.f32 0.0, %v718
  %v720 = vpop.f32.mrb[0].mxu0
  %v721 = vadd.f32 0.0, %v720
  %722 = vmatprep.mubr.bf16.mxu0 0
  %723 = vmatmul.mubr.bf16.gmra.mrb[0].mxu0 %v494
  %v724 = vpop.f32.mrb[0].mxu0
  %v725 = vadd.f32 0.0, %v724
  %v726 = vpop.f32.mrb[0].mxu0
  %v727 = vadd.f32 0.0, %v726
  %v728 = vpop.f32.mrb[0].mxu0
  %v729 = vadd.f32 0.0, %v728
  %v730 = vpop.f32.mrb[0].mxu0
  %v731 = vadd.f32 0.0, %v730
  %732 = vmatprep.mubr.bf16.mxu0 0
  %733 = vmatmul.mubr.bf16.gmra.mrb[0].mxu0 %v497
  %v734 = vpop.f32.mrb[0].mxu0
  %v735 = vadd.f32 0.0, %v734
  %v736 = vpop.f32.mrb[0].mxu0
  %v737 = vadd.f32 0.0, %v736
  %v738 = vpop.f32.mrb[0].mxu0
  %v739 = vadd.f32 0.0, %v738
  %v740 = vpop.f32.mrb[0].mxu0
  %v741 = vadd.f32 0.0, %v740
  %742 = vdwg.mxu0
  %743 = vmatprep.subr.bf16.mxu0 %v453
  %744 = vmatpush1.bf16.msra.mxu0 %v452
  %745 = vmatprep.subr.bf16.mxu0 %v461
  %746 = vmatpush1.bf16.msra.mxu0 %v460
  %747 = vmatprep.subr.bf16.mxu0 %v522
  %748 = vmatpush1.bf16.msra.mxu0 %v519
  %749 = vmatprep.subr.bf16.mxu0 0
  %750 = vmatpush1.bf16.msra.mxu0 0
  %751 = vmatprep.subr.bf16.mxu0 0
  %752 = vmatpush1.bf16.msra.mxu0 0
  %753 = vmatprep.subr.bf16.mxu0 0
  %754 = vmatpush1.bf16.msra.mxu0 0
  %755 = vmatprep.subr.bf16.mxu0 0
  %756 = vmatpush1.bf16.msra.mxu0 0
  %757 = vmatprep.subr.bf16.mxu0 0
  %758 = vmatpush1.bf16.msra.mxu0 0
  %759 = vmatprep.subr.bf16.mxu0 0
  %760 = vmatpush1.bf16.msra.mxu0 0
  %761 = vmatprep.subr.bf16.mxu0 0
  %762 = vmatpush1.bf16.msra.mxu0 0
  %763 = vmatprep.subr.bf16.mxu0 0
  %764 = vmatpush1.bf16.msra.mxu0 0
  %765 = vmatprep.subr.bf16.mxu0 0
  %766 = vmatpush1.bf16.msra.mxu0 0
  %767 = vmatprep.subr.bf16.mxu0 0
  %768 = vmatpush1.bf16.msra.mxu0 0
  %769 = vmatprep.subr.bf16.mxu0 0
  %770 = vmatpush1.bf16.msra.mxu0 0
  %771 = vmatprep.subr.bf16.mxu0 0
  %772 = vmatpush1.bf16.msra.mxu0 0
  %773 = vmatprep.subr.bf16.mxu0 0
  %774 = vmatpush1.bf16.msra.mxu0 0
  %775 = vmatprep.mubr.bf16.mxu0 0
  %776 = vmatmul.mubr.bf16.gmra.mrb[0].mxu0 %v488
  %v777 = vpop.f32.mrb[0].mxu0
  %v778 = vadd.f32 0.0, %v777
  %v779 = vpop.f32.mrb[0].mxu0
  %v780 = vadd.f32 0.0, %v779
  %v781 = vpop.f32.mrb[0].mxu0
  %v782 = vadd.f32 0.0, %v781
  %v783 = vpop.f32.mrb[0].mxu0
  %v784 = vadd.f32 0.0, %v783
  %785 = vmatprep.mubr.bf16.mxu0 0
  %786 = vmatmul.mubr.bf16.gmra.mrb[0].mxu0 %v491
  %v787 = vpop.f32.mrb[0].mxu0
  %v788 = vadd.f32 0.0, %v787
  %v789 = vpop.f32.mrb[0].mxu0
  %v790 = vadd.f32 0.0, %v789
  %v791 = vpop.f32.mrb[0].mxu0
  %v792 = vadd.f32 0.0, %v791
  %v793 = vpop.f32.mrb[0].mxu0
  %v794 = vadd.f32 0.0, %v793
  %795 = vmatprep.mubr.bf16.mxu0 0
  %796 = vmatmul.mubr.bf16.gmra.mrb[0].mxu0 %v494
  %v797 = vpop.f32.mrb[0].mxu0
  %v798 = vadd.f32 0.0, %v797
  %v799 = vpop.f32.mrb[0].mxu0
  %v800 = vadd.f32 0.0, %v799
  %v801 = vpop.f32.mrb[0].mxu0
  %v802 = vadd.f32 0.0, %v801
  %v803 = vpop.f32.mrb[0].mxu0
  %v804 = vadd.f32 0.0, %v803
  %805 = vmatprep.mubr.bf16.mxu0 0
  %806 = vmatmul.mubr.bf16.gmra.mrb[0].mxu0 %v497
  %v807 = vpop.f32.mrb[0].mxu0
  %v808 = vadd.f32 0.0, %v807
  %v809 = vpop.f32.mrb[0].mxu0
  %v810 = vadd.f32 0.0, %v809
  %v811 = vpop.f32.mrb[0].mxu0
  %v812 = vadd.f32 0.0, %v811
  %v813 = vpop.f32.mrb[0].mxu0
  %v814 = vadd.f32 0.0, %v813
  %815 = vdwg.mxu0
  %v824 = vcombine.low %v209, %v211
  %v825 = vcombine.high %v209, %v211
  %v826 = vcombine.low %v250, %v252
  %v827 = vcombine.high %v250, %v252
  %v828 = vcombine.low %v291, %v293
  %v829 = vcombine.high %v291, %v293
  %v830 = vcombine.low %v332, %v334
  %v831 = vcombine.high %v332, %v334
  %v833 = vunpack.c.l.s4 1966171168
  %v834 = vunpack.c.0.s8 %v833
  %v835 = vlaneseq
  %v836 = vshrl.u32 %v835, 7
  %v837 = vsub.s32 %v834, %v836
  %v838 = vrot.slane %v824, %v837
  %v840 = vunpack.c.l.s4 1966171168
  %v841 = vunpack.c.0.s8 %v840
  %v842 = vlaneseq
  %v843 = vshrl.u32 %v842, 7
  %v844 = vsub.s32 %v841, %v843
  %v845 = vrot.slane %v825, %v844
  %v847 = vunpack.c.l.s4 1966171168
  %v848 = vunpack.c.0.s8 %v847
  %v849 = vlaneseq
  %v850 = vshrl.u32 %v849, 7
  %v851 = vsub.s32 %v848, %v850
  %v852 = vrot.slane %v826, %v851
  %v854 = vunpack.c.l.s4 1966171168
  %v855 = vunpack.c.0.s8 %v854
  %v856 = vlaneseq
  %v857 = vshrl.u32 %v856, 7
  %v858 = vsub.s32 %v855, %v857
  %v859 = vrot.slane %v827, %v858
  %v861 = vunpack.c.l.s4 1966171168
  %v862 = vunpack.c.0.s8 %v861
  %v863 = vlaneseq
  %v864 = vshrl.u32 %v863, 7
  %v865 = vsub.s32 %v862, %v864
  %v866 = vrot.slane %v828, %v865
  %v868 = vunpack.c.l.s4 1966171168
  %v869 = vunpack.c.0.s8 %v868
  %v870 = vlaneseq
  %v871 = vshrl.u32 %v870, 7
  %v872 = vsub.s32 %v869, %v871
  %v873 = vrot.slane %v829, %v872
  %v875 = vunpack.c.l.s4 1966171168
  %v876 = vunpack.c.0.s8 %v875
  %v877 = vlaneseq
  %v878 = vshrl.u32 %v877, 7
  %v879 = vsub.s32 %v876, %v878
  %v880 = vrot.slane %v830, %v879
  %v882 = vunpack.c.l.s4 1966171168
  %v883 = vunpack.c.0.s8 %v882
  %v884 = vlaneseq
  %v885 = vshrl.u32 %v884, 7
  %v886 = vsub.s32 %v883, %v885
  %v887 = vrot.slane %v831, %v886
  %v888 = vcombine.low %v838, %v852
  %v889 = vcombine.high %v838, %v852
  %v890 = vcombine.low %v845, %v859
  %v891 = vcombine.high %v845, %v859
  %v892 = vcombine.low %v866, %v880
  %v893 = vcombine.high %v866, %v880
  %v894 = vcombine.low %v873, %v887
  %v895 = vcombine.high %v873, %v887
  %v897 = vunpack.c.l.s4 1966171168
  %v898 = vunpack.c.0.s8 %v897
  %v899 = vlaneseq
  %v900 = vshrl.u32 %v899, 7
  %v901 = vsub.s32 %v898, %v900
  %v902 = vrot.slane %v888, %v901
  %v904 = vunpack.c.l.s4 1966171168
  %v905 = vunpack.c.0.s8 %v904
  %v906 = vlaneseq
  %v907 = vshrl.u32 %v906, 7
  %v908 = vsub.s32 %v905, %v907
  %v909 = vrot.slane %v890, %v908
  %v911 = vunpack.c.l.s4 1966171168
  %v912 = vunpack.c.0.s8 %v911
  %v913 = vlaneseq
  %v914 = vshrl.u32 %v913, 7
  %v915 = vsub.s32 %v912, %v914
  %v916 = vrot.slane %v889, %v915
  %v918 = vunpack.c.l.s4 1966171168
  %v919 = vunpack.c.0.s8 %v918
  %v920 = vlaneseq
  %v921 = vshrl.u32 %v920, 7
  %v922 = vsub.s32 %v919, %v921
  %v923 = vrot.slane %v891, %v922
  %v925 = vunpack.c.l.s4 1966171168
  %v926 = vunpack.c.0.s8 %v925
  %v927 = vlaneseq
  %v928 = vshrl.u32 %v927, 7
  %v929 = vsub.s32 %v926, %v928
  %v930 = vrot.slane %v892, %v929
  %v932 = vunpack.c.l.s4 1966171168
  %v933 = vunpack.c.0.s8 %v932
  %v934 = vlaneseq
  %v935 = vshrl.u32 %v934, 7
  %v936 = vsub.s32 %v933, %v935
  %v937 = vrot.slane %v894, %v936
  %v939 = vunpack.c.l.s4 1966171168
  %v940 = vunpack.c.0.s8 %v939
  %v941 = vlaneseq
  %v942 = vshrl.u32 %v941, 7
  %v943 = vsub.s32 %v940, %v942
  %v944 = vrot.slane %v893, %v943
  %v946 = vunpack.c.l.s4 1966171168
  %v947 = vunpack.c.0.s8 %v946
  %v948 = vlaneseq
  %v949 = vshrl.u32 %v948, 7
  %v950 = vsub.s32 %v947, %v949
  %v951 = vrot.slane %v895, %v950
  %v952 = vcombine.low %v902, %v930
  %v953 = vcombine.high %v902, %v930
  %v954 = vcombine.low %v909, %v937
  %v955 = vcombine.high %v909, %v937
  %v956 = vcombine.low %v916, %v944
  %v957 = vcombine.high %v916, %v944
  %v958 = vcombine.low %v923, %v951
  %v959 = vcombine.high %v923, %v951
  %v960 = vlaneseq
  %v961 = vshrl.u32 %v960, 7
  %v962 = vsub.s32 0, %v961
  %v963 = vrot.slane %v952, %v962
  %v964 = vlaneseq
  %v965 = vshrl.u32 %v964, 7
  %v966 = vsub.s32 1, %v965
  %v967 = vrot.slane %v952, %v966
  %v968 = vlaneseq
  %v969 = vshrl.u32 %v968, 7
  %v970 = vsub.s32 2, %v969
  %v971 = vrot.slane %v952, %v970
  %v972 = vlaneseq
  %v973 = vshrl.u32 %v972, 7
  %v974 = vsub.s32 3, %v973
  %v975 = vrot.slane %v952, %v974
  %v976 = vlaneseq
  %v977 = vshrl.u32 %v976, 7
  %v978 = vsub.s32 4, %v977
  %v979 = vrot.slane %v952, %v978
  %v980 = vlaneseq
  %v981 = vshrl.u32 %v980, 7
  %v982 = vsub.s32 5, %v981
  %v983 = vrot.slane %v952, %v982
  %v984 = vlaneseq
  %v985 = vshrl.u32 %v984, 7
  %v986 = vsub.s32 6, %v985
  %v987 = vrot.slane %v952, %v986
  %v988 = vlaneseq
  %v989 = vshrl.u32 %v988, 7
  %v990 = vsub.s32 7, %v989
  %v991 = vrot.slane %v952, %v990
  %v992 = vlaneseq
  %v993 = vshrl.u32 %v992, 7
  %v994 = vsub.s32 0, %v993
  %v995 = vrot.slane %v956, %v994
  %v996 = vlaneseq
  %v997 = vshrl.u32 %v996, 7
  %v998 = vsub.s32 1, %v997
  %v999 = vrot.slane %v956, %v998
  %v1000 = vlaneseq
  %v1001 = vshrl.u32 %v1000, 7
  %v1002 = vsub.s32 2, %v1001
  %v1003 = vrot.slane %v956, %v1002
  %v1004 = vlaneseq
  %v1005 = vshrl.u32 %v1004, 7
  %v1006 = vsub.s32 3, %v1005
  %v1007 = vrot.slane %v956, %v1006
  %v1008 = vlaneseq
  %v1009 = vshrl.u32 %v1008, 7
  %v1010 = vsub.s32 4, %v1009
  %v1011 = vrot.slane %v956, %v1010
  %v1012 = vlaneseq
  %v1013 = vshrl.u32 %v1012, 7
  %v1014 = vsub.s32 5, %v1013
  %v1015 = vrot.slane %v956, %v1014
  %v1016 = vlaneseq
  %v1017 = vshrl.u32 %v1016, 7
  %v1018 = vsub.s32 6, %v1017
  %v1019 = vrot.slane %v956, %v1018
  %v1020 = vlaneseq
  %v1021 = vshrl.u32 %v1020, 7
  %v1022 = vsub.s32 7, %v1021
  %v1023 = vrot.slane %v956, %v1022
  %v1024 = vlaneseq
  %v1025 = vshrl.u32 %v1024, 7
  %v1026 = vsub.s32 0, %v1025
  %v1027 = vrot.slane %v953, %v1026
  %v1028 = vlaneseq
  %v1029 = vshrl.u32 %v1028, 7
  %v1030 = vsub.s32 1, %v1029
  %v1031 = vrot.slane %v953, %v1030
  %v1032 = vlaneseq
  %v1033 = vshrl.u32 %v1032, 7
  %v1034 = vsub.s32 2, %v1033
  %v1035 = vrot.slane %v953, %v1034
  %v1036 = vlaneseq
  %v1037 = vshrl.u32 %v1036, 7
  %v1038 = vsub.s32 3, %v1037
  %v1039 = vrot.slane %v953, %v1038
  %v1040 = vlaneseq
  %v1041 = vshrl.u32 %v1040, 7
  %v1042 = vsub.s32 4, %v1041
  %v1043 = vrot.slane %v953, %v1042
  %v1044 = vlaneseq
  %v1045 = vshrl.u32 %v1044, 7
  %v1046 = vsub.s32 5, %v1045
  %v1047 = vrot.slane %v953, %v1046
  %v1048 = vlaneseq
  %v1049 = vshrl.u32 %v1048, 7
  %v1050 = vsub.s32 6, %v1049
  %v1051 = vrot.slane %v953, %v1050
  %v1052 = vlaneseq
  %v1053 = vshrl.u32 %v1052, 7
  %v1054 = vsub.s32 7, %v1053
  %v1055 = vrot.slane %v953, %v1054
  %v1056 = vlaneseq
  %v1057 = vshrl.u32 %v1056, 7
  %v1058 = vsub.s32 0, %v1057
  %v1059 = vrot.slane %v957, %v1058
  %v1060 = vlaneseq
  %v1061 = vshrl.u32 %v1060, 7
  %v1062 = vsub.s32 1, %v1061
  %v1063 = vrot.slane %v957, %v1062
  %v1064 = vlaneseq
  %v1065 = vshrl.u32 %v1064, 7
  %v1066 = vsub.s32 2, %v1065
  %v1067 = vrot.slane %v957, %v1066
  %v1068 = vlaneseq
  %v1069 = vshrl.u32 %v1068, 7
  %v1070 = vsub.s32 3, %v1069
  %v1071 = vrot.slane %v957, %v1070
  %v1072 = vlaneseq
  %v1073 = vshrl.u32 %v1072, 7
  %v1074 = vsub.s32 4, %v1073
  %v1075 = vrot.slane %v957, %v1074
  %v1076 = vlaneseq
  %v1077 = vshrl.u32 %v1076, 7
  %v1078 = vsub.s32 5, %v1077
  %v1079 = vrot.slane %v957, %v1078
  %v1080 = vlaneseq
  %v1081 = vshrl.u32 %v1080, 7
  %v1082 = vsub.s32 6, %v1081
  %v1083 = vrot.slane %v957, %v1082
  %v1084 = vlaneseq
  %v1085 = vshrl.u32 %v1084, 7
  %v1086 = vsub.s32 7, %v1085
  %v1087 = vrot.slane %v957, %v1086
  %v1088 = vlaneseq
  %v1089 = vshrl.u32 %v1088, 7
  %v1090 = vsub.s32 0, %v1089
  %v1091 = vrot.slane %v954, %v1090
  %v1092 = vlaneseq
  %v1093 = vshrl.u32 %v1092, 7
  %v1094 = vsub.s32 1, %v1093
  %v1095 = vrot.slane %v954, %v1094
  %v1096 = vlaneseq
  %v1097 = vshrl.u32 %v1096, 7
  %v1098 = vsub.s32 2, %v1097
  %v1099 = vrot.slane %v954, %v1098
  %v1100 = vlaneseq
  %v1101 = vshrl.u32 %v1100, 7
  %v1102 = vsub.s32 3, %v1101
  %v1103 = vrot.slane %v954, %v1102
  %v1104 = vlaneseq
  %v1105 = vshrl.u32 %v1104, 7
  %v1106 = vsub.s32 4, %v1105
  %v1107 = vrot.slane %v954, %v1106
  %v1108 = vlaneseq
  %v1109 = vshrl.u32 %v1108, 7
  %v1110 = vsub.s32 5, %v1109
  %v1111 = vrot.slane %v954, %v1110
  %v1112 = vlaneseq
  %v1113 = vshrl.u32 %v1112, 7
  %v1114 = vsub.s32 6, %v1113
  %v1115 = vrot.slane %v954, %v1114
  %v1116 = vlaneseq
  %v1117 = vshrl.u32 %v1116, 7
  %v1118 = vsub.s32 7, %v1117
  %v1119 = vrot.slane %v954, %v1118
  %v1120 = vlaneseq
  %v1121 = vshrl.u32 %v1120, 7
  %v1122 = vsub.s32 0, %v1121
  %v1123 = vrot.slane %v958, %v1122
  %v1124 = vlaneseq
  %v1125 = vshrl.u32 %v1124, 7
  %v1126 = vsub.s32 1, %v1125
  %v1127 = vrot.slane %v958, %v1126
  %v1128 = vlaneseq
  %v1129 = vshrl.u32 %v1128, 7
  %v1130 = vsub.s32 2, %v1129
  %v1131 = vrot.slane %v958, %v1130
  %v1132 = vlaneseq
  %v1133 = vshrl.u32 %v1132, 7
  %v1134 = vsub.s32 3, %v1133
  %v1135 = vrot.slane %v958, %v1134
  %v1136 = vlaneseq
  %v1137 = vshrl.u32 %v1136, 7
  %v1138 = vsub.s32 4, %v1137
  %v1139 = vrot.slane %v958, %v1138
  %v1140 = vlaneseq
  %v1141 = vshrl.u32 %v1140, 7
  %v1142 = vsub.s32 5, %v1141
  %v1143 = vrot.slane %v958, %v1142
  %v1144 = vlaneseq
  %v1145 = vshrl.u32 %v1144, 7
  %v1146 = vsub.s32 6, %v1145
  %v1147 = vrot.slane %v958, %v1146
  %v1148 = vlaneseq
  %v1149 = vshrl.u32 %v1148, 7
  %v1150 = vsub.s32 7, %v1149
  %v1151 = vrot.slane %v958, %v1150
  %v1152 = vlaneseq
  %v1153 = vshrl.u32 %v1152, 7
  %v1154 = vsub.s32 0, %v1153
  %v1155 = vrot.slane %v955, %v1154
  %v1156 = vlaneseq
  %v1157 = vshrl.u32 %v1156, 7
  %v1158 = vsub.s32 1, %v1157
  %v1159 = vrot.slane %v955, %v1158
  %v1160 = vlaneseq
  %v1161 = vshrl.u32 %v1160, 7
  %v1162 = vsub.s32 2, %v1161
  %v1163 = vrot.slane %v955, %v1162
  %v1164 = vlaneseq
  %v1165 = vshrl.u32 %v1164, 7
  %v1166 = vsub.s32 3, %v1165
  %v1167 = vrot.slane %v955, %v1166
  %v1168 = vlaneseq
  %v1169 = vshrl.u32 %v1168, 7
  %v1170 = vsub.s32 4, %v1169
  %v1171 = vrot.slane %v955, %v1170
  %v1172 = vlaneseq
  %v1173 = vshrl.u32 %v1172, 7
  %v1174 = vsub.s32 5, %v1173
  %v1175 = vrot.slane %v955, %v1174
  %v1176 = vlaneseq
  %v1177 = vshrl.u32 %v1176, 7
  %v1178 = vsub.s32 6, %v1177
  %v1179 = vrot.slane %v955, %v1178
  %v1180 = vlaneseq
  %v1181 = vshrl.u32 %v1180, 7
  %v1182 = vsub.s32 7, %v1181
  %v1183 = vrot.slane %v955, %v1182
  %v1184 = vlaneseq
  %v1185 = vshrl.u32 %v1184, 7
  %v1186 = vsub.s32 0, %v1185
  %v1187 = vrot.slane %v959, %v1186
  %v1188 = vlaneseq
  %v1189 = vshrl.u32 %v1188, 7
  %v1190 = vsub.s32 1, %v1189
  %v1191 = vrot.slane %v959, %v1190
  %v1192 = vlaneseq
  %v1193 = vshrl.u32 %v1192, 7
  %v1194 = vsub.s32 2, %v1193
  %v1195 = vrot.slane %v959, %v1194
  %v1196 = vlaneseq
  %v1197 = vshrl.u32 %v1196, 7
  %v1198 = vsub.s32 3, %v1197
  %v1199 = vrot.slane %v959, %v1198
  %v1200 = vlaneseq
  %v1201 = vshrl.u32 %v1200, 7
  %v1202 = vsub.s32 4, %v1201
  %v1203 = vrot.slane %v959, %v1202
  %v1204 = vlaneseq
  %v1205 = vshrl.u32 %v1204, 7
  %v1206 = vsub.s32 5, %v1205
  %v1207 = vrot.slane %v959, %v1206
  %v1208 = vlaneseq
  %v1209 = vshrl.u32 %v1208, 7
  %v1210 = vsub.s32 6, %v1209
  %v1211 = vrot.slane %v959, %v1210
  %v1212 = vlaneseq
  %v1213 = vshrl.u32 %v1212, 7
  %v1214 = vsub.s32 7, %v1213
  %v1215 = vrot.slane %v959, %v1214
  %v1280 = vadd.f32 %v559, %v963
  %v1281 = vadd.f32 %v561, %v967
  %v1282 = vadd.f32 %v632, %v971
  %v1283 = vadd.f32 %v634, %v975
  %v1284 = vadd.f32 %v705, %v979
  %v1285 = vadd.f32 %v707, %v983
  %v1286 = vadd.f32 %v778, %v987
  %v1287 = vadd.f32 %v780, %v991
  %v1288 = vadd.f32 %v563, %v995
  %v1289 = vadd.f32 %v565, %v999
  %v1290 = vadd.f32 %v636, %v1003
  %v1291 = vadd.f32 %v638, %v1007
  %v1292 = vadd.f32 %v709, %v1011
  %v1293 = vadd.f32 %v711, %v1015
  %v1294 = vadd.f32 %v782, %v1019
  %v1295 = vadd.f32 %v784, %v1023
  %v1296 = vadd.f32 %v569, %v1027
  %v1297 = vadd.f32 %v571, %v1031
  %v1298 = vadd.f32 %v642, %v1035
  %v1299 = vadd.f32 %v644, %v1039
  %v1300 = vadd.f32 %v715, %v1043
  %v1301 = vadd.f32 %v717, %v1047
  %v1302 = vadd.f32 %v788, %v1051
  %v1303 = vadd.f32 %v790, %v1055
  %v1304 = vadd.f32 %v573, %v1059
  %v1305 = vadd.f32 %v575, %v1063
  %v1306 = vadd.f32 %v646, %v1067
  %v1307 = vadd.f32 %v648, %v1071
  %v1308 = vadd.f32 %v719, %v1075
  %v1309 = vadd.f32 %v721, %v1079
  %v1310 = vadd.f32 %v792, %v1083
  %v1311 = vadd.f32 %v794, %v1087
  %v1312 = vadd.f32 %v579, %v1091
  %v1313 = vadd.f32 %v581, %v1095
  %v1314 = vadd.f32 %v652, %v1099
  %v1315 = vadd.f32 %v654, %v1103
  %v1316 = vadd.f32 %v725, %v1107
  %v1317 = vadd.f32 %v727, %v1111
  %v1318 = vadd.f32 %v798, %v1115
  %v1319 = vadd.f32 %v800, %v1119
  %v1320 = vadd.f32 %v583, %v1123
  %v1321 = vadd.f32 %v585, %v1127
  %v1322 = vadd.f32 %v656, %v1131
  %v1323 = vadd.f32 %v658, %v1135
  %v1324 = vadd.f32 %v729, %v1139
  %v1325 = vadd.f32 %v731, %v1143
  %v1326 = vadd.f32 %v802, %v1147
  %v1327 = vadd.f32 %v804, %v1151
  %v1328 = vadd.f32 %v589, %v1155
  %v1329 = vadd.f32 %v591, %v1159
  %v1330 = vadd.f32 %v662, %v1163
  %v1331 = vadd.f32 %v664, %v1167
  %v1332 = vadd.f32 %v735, %v1171
  %v1333 = vadd.f32 %v737, %v1175
  %v1334 = vadd.f32 %v808, %v1179
  %v1335 = vadd.f32 %v810, %v1183
  %v1336 = vadd.f32 %v593, %v1187
  %v1337 = vadd.f32 %v595, %v1191
  %v1338 = vadd.f32 %v666, %v1195
  %v1339 = vadd.f32 %v668, %v1199
  %v1340 = vadd.f32 %v739, %v1203
  %v1341 = vadd.f32 %v741, %v1207
  %v1342 = vadd.f32 %v812, %v1211
  %v1343 = vadd.f32 %v814, %v1215
  %v1344 = vmul.f32 %v1280, 0.2
  %v1345 = vmul.f32 %v1281, 0.2
  %v1346 = vmul.f32 %v1282, 0.2
  %v1347 = vmul.f32 %v1283, 0.2
  %v1348 = vmul.f32 %v1284, 0.2
  %v1349 = vmul.f32 %v1285, 0.2
  %v1350 = vmul.f32 %v1286, 0.2
  %v1351 = vmul.f32 %v1287, 0.2
  %v1352 = vmul.f32 %v1288, 0.2
  %v1353 = vmul.f32 %v1289, 0.2
  %v1354 = vmul.f32 %v1290, 0.2
  %v1355 = vmul.f32 %v1291, 0.2
  %v1356 = vmul.f32 %v1292, 0.2
  %v1357 = vmul.f32 %v1293, 0.2
  %v1358 = vmul.f32 %v1294, 0.2
  %v1359 = vmul.f32 %v1295, 0.2
  %v1360 = vmul.f32 %v1296, 0.2
  %v1361 = vmul.f32 %v1297, 0.2
  %v1362 = vmul.f32 %v1298, 0.2
  %v1363 = vmul.f32 %v1299, 0.2
  %v1364 = vmul.f32 %v1300, 0.2
  %v1365 = vmul.f32 %v1301, 0.2
  %v1366 = vmul.f32 %v1302, 0.2
  %v1367 = vmul.f32 %v1303, 0.2
  %v1368 = vmul.f32 %v1304, 0.2
  %v1369 = vmul.f32 %v1305, 0.2
  %v1370 = vmul.f32 %v1306, 0.2
  %v1371 = vmul.f32 %v1307, 0.2
  %v1372 = vmul.f32 %v1308, 0.2
  %v1373 = vmul.f32 %v1309, 0.2
  %v1374 = vmul.f32 %v1310, 0.2
  %v1375 = vmul.f32 %v1311, 0.2
  %v1376 = vmul.f32 %v1312, 0.2
  %v1377 = vmul.f32 %v1313, 0.2
  %v1378 = vmul.f32 %v1314, 0.2
  %v1379 = vmul.f32 %v1315, 0.2
  %v1380 = vmul.f32 %v1316, 0.2
  %v1381 = vmul.f32 %v1317, 0.2
  %v1382 = vmul.f32 %v1318, 0.2
  %v1383 = vmul.f32 %v1319, 0.2
  %v1384 = vmul.f32 %v1320, 0.2
  %v1385 = vmul.f32 %v1321, 0.2
  %v1386 = vmul.f32 %v1322, 0.2
  %v1387 = vmul.f32 %v1323, 0.2
  %v1388 = vmul.f32 %v1324, 0.2
  %v1389 = vmul.f32 %v1325, 0.2
  %v1390 = vmul.f32 %v1326, 0.2
  %v1391 = vmul.f32 %v1327, 0.2
  %v1392 = vmul.f32 %v1328, 0.2
  %v1393 = vmul.f32 %v1329, 0.2
  %v1394 = vmul.f32 %v1330, 0.2
  %v1395 = vmul.f32 %v1331, 0.2
  %v1396 = vmul.f32 %v1332, 0.2
  %v1397 = vmul.f32 %v1333, 0.2
  %v1398 = vmul.f32 %v1334, 0.2
  %v1399 = vmul.f32 %v1335, 0.2
  %v1400 = vmul.f32 %v1336, 0.2
  %v1401 = vmul.f32 %v1337, 0.2
  %v1402 = vmul.f32 %v1338, 0.2
  %v1403 = vmul.f32 %v1339, 0.2
  %v1404 = vmul.f32 %v1340, 0.2
  %v1405 = vmul.f32 %v1341, 0.2
  %v1406 = vmul.f32 %v1342, 0.2
  %v1407 = vmul.f32 %v1343, 0.2
  %v1408 = vmax.f32 %v1280, %v1344
  %v1409 = vmax.f32 %v1281, %v1345
  %v1410 = vmax.f32 %v1282, %v1346
  %v1411 = vmax.f32 %v1283, %v1347
  %v1412 = vmax.f32 %v1284, %v1348
  %v1413 = vmax.f32 %v1285, %v1349
  %v1414 = vmax.f32 %v1286, %v1350
  %v1415 = vmax.f32 %v1287, %v1351
  %v1416 = vmax.f32 %v1288, %v1352
  %v1417 = vmax.f32 %v1289, %v1353
  %v1418 = vmax.f32 %v1290, %v1354
  %v1419 = vmax.f32 %v1291, %v1355
  %v1420 = vmax.f32 %v1292, %v1356
  %v1421 = vmax.f32 %v1293, %v1357
  %v1422 = vmax.f32 %v1294, %v1358
  %v1423 = vmax.f32 %v1295, %v1359
  %v1424 = vmax.f32 %v1296, %v1360
  %v1425 = vmax.f32 %v1297, %v1361
  %v1426 = vmax.f32 %v1298, %v1362
  %v1427 = vmax.f32 %v1299, %v1363
  %v1428 = vmax.f32 %v1300, %v1364
  %v1429 = vmax.f32 %v1301, %v1365
  %v1430 = vmax.f32 %v1302, %v1366
  %v1431 = vmax.f32 %v1303, %v1367
  %v1432 = vmax.f32 %v1304, %v1368
  %v1433 = vmax.f32 %v1305, %v1369
  %v1434 = vmax.f32 %v1306, %v1370
  %v1435 = vmax.f32 %v1307, %v1371
  %v1436 = vmax.f32 %v1308, %v1372
  %v1437 = vmax.f32 %v1309, %v1373
  %v1438 = vmax.f32 %v1310, %v1374
  %v1439 = vmax.f32 %v1311, %v1375
  %v1440 = vmax.f32 %v1312, %v1376
  %v1441 = vmax.f32 %v1313, %v1377
  %v1442 = vmax.f32 %v1314, %v1378
  %v1443 = vmax.f32 %v1315, %v1379
  %v1444 = vmax.f32 %v1316, %v1380
  %v1445 = vmax.f32 %v1317, %v1381
  %v1446 = vmax.f32 %v1318, %v1382
  %v1447 = vmax.f32 %v1319, %v1383
  %v1448 = vmax.f32 %v1320, %v1384
  %v1449 = vmax.f32 %v1321, %v1385
  %v1450 = vmax.f32 %v1322, %v1386
  %v1451 = vmax.f32 %v1323, %v1387
  %v1452 = vmax.f32 %v1324, %v1388
  %v1453 = vmax.f32 %v1325, %v1389
  %v1454 = vmax.f32 %v1326, %v1390
  %v1455 = vmax.f32 %v1327, %v1391
  %v1456 = vmax.f32 %v1328, %v1392
  %v1457 = vmax.f32 %v1329, %v1393
  %v1458 = vmax.f32 %v1330, %v1394
  %v1459 = vmax.f32 %v1331, %v1395
  %v1460 = vmax.f32 %v1332, %v1396
  %v1461 = vmax.f32 %v1333, %v1397
  %v1462 = vmax.f32 %v1334, %v1398
  %v1463 = vmax.f32 %v1335, %v1399
  %v1464 = vmax.f32 %v1336, %v1400
  %v1465 = vmax.f32 %v1337, %v1401
  %v1466 = vmax.f32 %v1338, %v1402
  %v1467 = vmax.f32 %v1339, %v1403
  %v1468 = vmax.f32 %v1340, %v1404
  %v1469 = vmax.f32 %v1341, %v1405
  %v1470 = vmax.f32 %v1342, %v1406
  %v1471 = vmax.f32 %v1343, %v1407
  %v1472 = vld [vmem:[%s7] sm:$0xff]
  %v1474 = vlaneseq
  %v1475 = vshrl.u32 %v1474, 7
  %v1476 = vsub.s32 0, %v1475
  %v1477 = vrot.slane %v1472, %v1476
  %v1478 = vlaneseq
  %v1479 = vshrl.u32 %v1478, 7
  %v1480 = vsub.s32 1, %v1479
  %v1481 = vrot.slane %v1472, %v1480
  %v1482 = vlaneseq
  %v1483 = vshrl.u32 %v1482, 7
  %v1484 = vsub.s32 2, %v1483
  %v1485 = vrot.slane %v1472, %v1484
  %v1486 = vlaneseq
  %v1487 = vshrl.u32 %v1486, 7
  %v1488 = vsub.s32 3, %v1487
  %v1489 = vrot.slane %v1472, %v1488
  %v1490 = vlaneseq
  %v1491 = vshrl.u32 %v1490, 7
  %v1492 = vsub.s32 4, %v1491
  %v1493 = vrot.slane %v1472, %v1492
  %v1494 = vlaneseq
  %v1495 = vshrl.u32 %v1494, 7
  %v1496 = vsub.s32 5, %v1495
  %v1497 = vrot.slane %v1472, %v1496
  %v1498 = vlaneseq
  %v1499 = vshrl.u32 %v1498, 7
  %v1500 = vsub.s32 6, %v1499
  %v1501 = vrot.slane %v1472, %v1500
  %v1502 = vlaneseq
  %v1503 = vshrl.u32 %v1502, 7
  %v1504 = vsub.s32 7, %v1503
  %v1505 = vrot.slane %v1472, %v1504
  %v1514 = vmul.f32 %v1408, %v1477
  %v1515 = vmul.f32 %v1409, %v1481
  %v1516 = vmul.f32 %v1410, %v1485
  %v1517 = vmul.f32 %v1411, %v1489
  %v1518 = vmul.f32 %v1412, %v1493
  %v1519 = vmul.f32 %v1413, %v1497
  %v1520 = vmul.f32 %v1414, %v1501
  %v1521 = vmul.f32 %v1415, %v1505
  %v1522 = vmul.f32 %v1416, %v1477
  %v1523 = vmul.f32 %v1417, %v1481
  %v1524 = vmul.f32 %v1418, %v1485
  %v1525 = vmul.f32 %v1419, %v1489
  %v1526 = vmul.f32 %v1420, %v1493
  %v1527 = vmul.f32 %v1421, %v1497
  %v1528 = vmul.f32 %v1422, %v1501
  %v1529 = vmul.f32 %v1423, %v1505
  %v1530 = vmul.f32 %v1424, %v1477
  %v1531 = vmul.f32 %v1425, %v1481
  %v1532 = vmul.f32 %v1426, %v1485
  %v1533 = vmul.f32 %v1427, %v1489
  %v1534 = vmul.f32 %v1428, %v1493
  %v1535 = vmul.f32 %v1429, %v1497
  %v1536 = vmul.f32 %v1430, %v1501
  %v1537 = vmul.f32 %v1431, %v1505
  %v1538 = vmul.f32 %v1432, %v1477
  %v1539 = vmul.f32 %v1433, %v1481
  %v1540 = vmul.f32 %v1434, %v1485
  %v1541 = vmul.f32 %v1435, %v1489
  %v1542 = vmul.f32 %v1436, %v1493
  %v1543 = vmul.f32 %v1437, %v1497
  %v1544 = vmul.f32 %v1438, %v1501
  %v1545 = vmul.f32 %v1439, %v1505
  %v1546 = vmul.f32 %v1440, %v1477
  %v1547 = vmul.f32 %v1441, %v1481
  %v1548 = vmul.f32 %v1442, %v1485
  %v1549 = vmul.f32 %v1443, %v1489
  %v1550 = vmul.f32 %v1444, %v1493
  %v1551 = vmul.f32 %v1445, %v1497
  %v1552 = vmul.f32 %v1446, %v1501
  %v1553 = vmul.f32 %v1447, %v1505
  %v1554 = vmul.f32 %v1448, %v1477
  %v1555 = vmul.f32 %v1449, %v1481
  %v1556 = vmul.f32 %v1450, %v1485
  %v1557 = vmul.f32 %v1451, %v1489
  %v1558 = vmul.f32 %v1452, %v1493
  %v1559 = vmul.f32 %v1453, %v1497
  %v1560 = vmul.f32 %v1454, %v1501
  %v1561 = vmul.f32 %v1455, %v1505
  %v1562 = vmul.f32 %v1456, %v1477
  %v1563 = vmul.f32 %v1457, %v1481
  %v1564 = vmul.f32 %v1458, %v1485
  %v1565 = vmul.f32 %v1459, %v1489
  %v1566 = vmul.f32 %v1460, %v1493
  %v1567 = vmul.f32 %v1461, %v1497
  %v1568 = vmul.f32 %v1462, %v1501
  %v1569 = vmul.f32 %v1463, %v1505
  %v1570 = vmul.f32 %v1464, %v1477
  %v1571 = vmul.f32 %v1465, %v1481
  %v1572 = vmul.f32 %v1466, %v1485
  %v1573 = vmul.f32 %v1467, %v1489
  %v1574 = vmul.f32 %v1468, %v1493
  %v1575 = vmul.f32 %v1469, %v1497
  %v1576 = vmul.f32 %v1470, %v1501
  %v1577 = vmul.f32 %v1471, %v1505
  %v1578 = vadd.f32 %v1514, %v1515
  %v1579 = vadd.f32 %v1578, %v1516
  %v1580 = vadd.f32 %v1579, %v1517
  %v1581 = vadd.f32 %v1580, %v1518
  %v1582 = vadd.f32 %v1581, %v1519
  %v1583 = vadd.f32 %v1582, %v1520
  %v1584 = vadd.f32 %v1583, %v1521
  %1585 = vadd.xlane.f32.xlu0 %v1584
  %v1586 = vpop.xlane.xlu0 %1585
  %v1587 = vadd.f32 %v1522, %v1523
  %v1588 = vadd.f32 %v1587, %v1524
  %v1589 = vadd.f32 %v1588, %v1525
  %v1590 = vadd.f32 %v1589, %v1526
  %v1591 = vadd.f32 %v1590, %v1527
  %v1592 = vadd.f32 %v1591, %v1528
  %v1593 = vadd.f32 %v1592, %v1529
  %1594 = vadd.xlane.f32.xlu0 %v1593
  %v1595 = vpop.xlane.xlu0 %1594
  %v1596 = vadd.f32 %v1530, %v1531
  %v1597 = vadd.f32 %v1596, %v1532
  %v1598 = vadd.f32 %v1597, %v1533
  %v1599 = vadd.f32 %v1598, %v1534
  %v1600 = vadd.f32 %v1599, %v1535
  %v1601 = vadd.f32 %v1600, %v1536
  %v1602 = vadd.f32 %v1601, %v1537
  %1603 = vadd.xlane.f32.xlu0 %v1602
  %v1604 = vpop.xlane.xlu0 %1603
  %v1605 = vadd.f32 %v1538, %v1539
  %v1606 = vadd.f32 %v1605, %v1540
  %v1607 = vadd.f32 %v1606, %v1541
  %v1608 = vadd.f32 %v1607, %v1542
  %v1609 = vadd.f32 %v1608, %v1543
  %v1610 = vadd.f32 %v1609, %v1544
  %v1611 = vadd.f32 %v1610, %v1545
  %1612 = vadd.xlane.f32.xlu0 %v1611
  %v1613 = vpop.xlane.xlu0 %1612
  %v1614 = vadd.f32 %v1546, %v1547
  %v1615 = vadd.f32 %v1614, %v1548
  %v1616 = vadd.f32 %v1615, %v1549
  %v1617 = vadd.f32 %v1616, %v1550
  %v1618 = vadd.f32 %v1617, %v1551
  %v1619 = vadd.f32 %v1618, %v1552
  %v1620 = vadd.f32 %v1619, %v1553
  %1621 = vadd.xlane.f32.xlu0 %v1620
  %v1622 = vpop.xlane.xlu0 %1621
  %v1623 = vadd.f32 %v1554, %v1555
  %v1624 = vadd.f32 %v1623, %v1556
  %v1625 = vadd.f32 %v1624, %v1557
  %v1626 = vadd.f32 %v1625, %v1558
  %v1627 = vadd.f32 %v1626, %v1559
  %v1628 = vadd.f32 %v1627, %v1560
  %v1629 = vadd.f32 %v1628, %v1561
  %1630 = vadd.xlane.f32.xlu0 %v1629
  %v1631 = vpop.xlane.xlu0 %1630
  %v1632 = vadd.f32 %v1562, %v1563
  %v1633 = vadd.f32 %v1632, %v1564
  %v1634 = vadd.f32 %v1633, %v1565
  %v1635 = vadd.f32 %v1634, %v1566
  %v1636 = vadd.f32 %v1635, %v1567
  %v1637 = vadd.f32 %v1636, %v1568
  %v1638 = vadd.f32 %v1637, %v1569
  %1639 = vadd.xlane.f32.xlu0 %v1638
  %v1640 = vpop.xlane.xlu0 %1639
  %v1641 = vadd.f32 %v1570, %v1571
  %v1642 = vadd.f32 %v1641, %v1572
  %v1643 = vadd.f32 %v1642, %v1573
  %v1644 = vadd.f32 %v1643, %v1574
  %v1645 = vadd.f32 %v1644, %v1575
  %v1646 = vadd.f32 %v1645, %v1576
  %v1647 = vadd.f32 %v1646, %v1577
  %1648 = vadd.xlane.f32.xlu0 %v1647
  %v1649 = vpop.xlane.xlu0 %1648
  %v1650 = vld [vmem:[%s2] sm:$0xff]
  %vm1651 = vcmp.gt.f32.partialorder %v1650, 0.5
  %v1660 = vlaneseq
  %v1661 = vand.u32 %v1660, 127
  %v1662 = vlaneseq
  %v1663 = vshrl.u32 %v1662, 7
  %v1664 = vsub.s32 %v1661, %v1663
  %v1665 = vrot.slane %v1586, %v1664
  %v1666 = vlaneseq
  %v1667 = vshrl.u32 %v1666, 7
  %v1668 = vsub.s32 %v1661, %v1667
  %v1669 = vrot.slane %v1595, %v1668
  %v1670 = vlaneseq
  %v1671 = vshrl.u32 %v1670, 7
  %v1672 = vsub.s32 %v1661, %v1671
  %v1673 = vrot.slane %v1604, %v1672
  %v1674 = vlaneseq
  %v1675 = vshrl.u32 %v1674, 7
  %v1676 = vsub.s32 %v1661, %v1675
  %v1677 = vrot.slane %v1613, %v1676
  %v1678 = vlaneseq
  %v1679 = vshrl.u32 %v1678, 7
  %v1680 = vsub.s32 %v1661, %v1679
  %v1681 = vrot.slane %v1622, %v1680
  %v1682 = vlaneseq
  %v1683 = vshrl.u32 %v1682, 7
  %v1684 = vsub.s32 %v1661, %v1683
  %v1685 = vrot.slane %v1631, %v1684
  %v1686 = vlaneseq
  %v1687 = vshrl.u32 %v1686, 7
  %v1688 = vsub.s32 %v1661, %v1687
  %v1689 = vrot.slane %v1640, %v1688
  %v1690 = vlaneseq
  %v1691 = vshrl.u32 %v1690, 7
  %v1692 = vsub.s32 %v1661, %v1691
  %v1693 = vrot.slane %v1649, %v1692
  %vm1694 = vcmask 1041409
  %v1695 = vsel %vm1694, %v1669, %v1665
  %vm1696 = vcmask 1042434
  %v1697 = vsel %vm1696, %v1673, %v1695
  %vm1698 = vcmask 1043459
  %v1699 = vsel %vm1698, %v1677, %v1697
  %vm1700 = vcmask 1044484
  %v1701 = vsel %vm1700, %v1681, %v1699
  %vm1702 = vcmask 1045509
  %v1703 = vsel %vm1702, %v1685, %v1701
  %vm1704 = vcmask 1046534
  %v1705 = vsel %vm1704, %v1689, %v1703
  %vm1706 = vcmask 1047559
  %v1707 = vsel %vm1706, %v1693, %v1705
  %v1709 = vsel %vm1651, %v1707, -1000000.0
  %vm1710 = vcmask 64512
  %v1711 = vsel %vm1710, %v1709, -inf
  %1712 = vmax.xlane.f32.xlu0 %v1711
  %v1713 = vpop.xlane.xlu0 %1712
  %v1714 = vsub.f32 %v1709, %v1713
  %v1715 = vmul.f32 %v1714, 1.442695
  %v1716 = vpow.pop %v1715
  %v1717 = vsel %vm1710, %v1716, 0.0
  %1718 = vadd.xlane.f32.xlu0 %v1717
  %v1719 = vpop.xlane.xlu0 %1718
  %v1720 = vrcp.pop %v1719
  %v1721 = vmul.f32 %v1716, %v1720
  %v1722 = vlaneseq
  %v1723 = vshrl.u32 %v1722, 7
  %v1724 = vsub.s32 0, %v1723
  %v1725 = vrot.slane %v1721, %v1724
  %1727 = vbcast.lane.b32.xlu0 %v1725, 256
  %v1728 = vpop.permute.xlu0 %1727
  %v1729 = vlaneseq
  %v1730 = vshrl.u32 %v1729, 7
  %v1731 = vsub.s32 1, %v1730
  %v1732 = vrot.slane %v1721, %v1731
  %1734 = vbcast.lane.b32.xlu0 %v1732, 256
  %v1735 = vpop.permute.xlu0 %1734
  %v1736 = vlaneseq
  %v1737 = vshrl.u32 %v1736, 7
  %v1738 = vsub.s32 2, %v1737
  %v1739 = vrot.slane %v1721, %v1738
  %1741 = vbcast.lane.b32.xlu0 %v1739, 256
  %v1742 = vpop.permute.xlu0 %1741
  %v1743 = vlaneseq
  %v1744 = vshrl.u32 %v1743, 7
  %v1745 = vsub.s32 3, %v1744
  %v1746 = vrot.slane %v1721, %v1745
  %1748 = vbcast.lane.b32.xlu0 %v1746, 256
  %v1749 = vpop.permute.xlu0 %1748
  %v1750 = vlaneseq
  %v1751 = vshrl.u32 %v1750, 7
  %v1752 = vsub.s32 4, %v1751
  %v1753 = vrot.slane %v1721, %v1752
  %1755 = vbcast.lane.b32.xlu0 %v1753, 256
  %v1756 = vpop.permute.xlu0 %1755
  %v1757 = vlaneseq
  %v1758 = vshrl.u32 %v1757, 7
  %v1759 = vsub.s32 5, %v1758
  %v1760 = vrot.slane %v1721, %v1759
  %1762 = vbcast.lane.b32.xlu0 %v1760, 256
  %v1763 = vpop.permute.xlu0 %1762
  %v1764 = vlaneseq
  %v1765 = vshrl.u32 %v1764, 7
  %v1766 = vsub.s32 6, %v1765
  %v1767 = vrot.slane %v1721, %v1766
  %1769 = vbcast.lane.b32.xlu0 %v1767, 256
  %v1770 = vpop.permute.xlu0 %1769
  %v1771 = vlaneseq
  %v1772 = vshrl.u32 %v1771, 7
  %v1773 = vsub.s32 7, %v1772
  %v1774 = vrot.slane %v1721, %v1773
  %1776 = vbcast.lane.b32.xlu0 %v1774, 256
  %v1777 = vpop.permute.xlu0 %1776
  %v1778 = vld [vmem:[%s3] sm:$0xff]
  %v1779 = vld [vmem:[%s3 + $0x8] sm:$0xff]
  %v1780 = vld [vmem:[%s3 + $0x10] sm:$0xff]
  %v1781 = vld [vmem:[%s3 + $0x18] sm:$0xff]
  %v1782 = vld [vmem:[%s3 + $0x20] sm:$0xff]
  %v1783 = vld [vmem:[%s3 + $0x28] sm:$0xff]
  %v1784 = vld [vmem:[%s3 + $0x30] sm:$0xff]
  %v1785 = vld [vmem:[%s3 + $0x38] sm:$0xff]
  %v1786 = vmul.f32 %v1728, %v1778
  %v1787 = vmul.f32 %v1735, %v1779
  %v1788 = vmul.f32 %v1742, %v1780
  %v1789 = vmul.f32 %v1749, %v1781
  %v1790 = vmul.f32 %v1756, %v1782
  %v1791 = vmul.f32 %v1763, %v1783
  %v1792 = vmul.f32 %v1770, %v1784
  %v1793 = vmul.f32 %v1777, %v1785
  %v1794 = vsel %vm170, %v1786, 0.0
  %v1795 = vrot.slane %v1794, 4
  %v1796 = vadd.f32 %v1794, %v1795
  %v1797 = vrot.slane %v1796, 2
  %v1798 = vadd.f32 %v1796, %v1797
  %v1799 = vrot.slane %v1798, 1
  %v1800 = vadd.f32 %v1798, %v1799
  %v1801 = vsel %vm170, %v1787, 0.0
  %v1802 = vrot.slane %v1801, 4
  %v1803 = vadd.f32 %v1801, %v1802
  %v1804 = vrot.slane %v1803, 2
  %v1805 = vadd.f32 %v1803, %v1804
  %v1806 = vrot.slane %v1805, 1
  %v1807 = vadd.f32 %v1805, %v1806
  %v1808 = vsel %vm170, %v1788, 0.0
  %v1809 = vrot.slane %v1808, 4
  %v1810 = vadd.f32 %v1808, %v1809
  %v1811 = vrot.slane %v1810, 2
  %v1812 = vadd.f32 %v1810, %v1811
  %v1813 = vrot.slane %v1812, 1
  %v1814 = vadd.f32 %v1812, %v1813
  %v1815 = vsel %vm170, %v1789, 0.0
  %v1816 = vrot.slane %v1815, 4
  %v1817 = vadd.f32 %v1815, %v1816
  %v1818 = vrot.slane %v1817, 2
  %v1819 = vadd.f32 %v1817, %v1818
  %v1820 = vrot.slane %v1819, 1
  %v1821 = vadd.f32 %v1819, %v1820
  %v1822 = vsel %vm170, %v1790, 0.0
  %v1823 = vrot.slane %v1822, 4
  %v1824 = vadd.f32 %v1822, %v1823
  %v1825 = vrot.slane %v1824, 2
  %v1826 = vadd.f32 %v1824, %v1825
  %v1827 = vrot.slane %v1826, 1
  %v1828 = vadd.f32 %v1826, %v1827
  %v1829 = vsel %vm170, %v1791, 0.0
  %v1830 = vrot.slane %v1829, 4
  %v1831 = vadd.f32 %v1829, %v1830
  %v1832 = vrot.slane %v1831, 2
  %v1833 = vadd.f32 %v1831, %v1832
  %v1834 = vrot.slane %v1833, 1
  %v1835 = vadd.f32 %v1833, %v1834
  %v1836 = vsel %vm170, %v1792, 0.0
  %v1837 = vrot.slane %v1836, 4
  %v1838 = vadd.f32 %v1836, %v1837
  %v1839 = vrot.slane %v1838, 2
  %v1840 = vadd.f32 %v1838, %v1839
  %v1841 = vrot.slane %v1840, 1
  %v1842 = vadd.f32 %v1840, %v1841
  %v1843 = vsel %vm170, %v1793, 0.0
  %v1844 = vrot.slane %v1843, 4
  %v1845 = vadd.f32 %v1843, %v1844
  %v1846 = vrot.slane %v1845, 2
  %v1847 = vadd.f32 %v1845, %v1846
  %v1848 = vrot.slane %v1847, 1
  %v1849 = vadd.f32 %v1847, %v1848
  %v1858 = vsel %vm1694, %v1807, %v1800
  %v1859 = vsel %vm1696, %v1814, %v1858
  %v1860 = vsel %vm1698, %v1821, %v1859
  %v1861 = vsel %vm1700, %v1828, %v1860
  %v1862 = vsel %vm1702, %v1835, %v1861
  %v1863 = vsel %vm1704, %v1842, %v1862
  %v1864 = vsel %vm1706, %v1849, %v1863
  %1866 = vst.msk [vmem:[%s8] sm:$0xff] %vm170, %v1864
  // Predicated region
  $region34: #{gcn_dense_aux_forward.6} parent=0 // pred_check
    _
  $region35: #{gcn_dense_aux_forward.6} parent=0 // pred_check_branch
    %1868 = sbr.rel (0) target = $region37
  $region36: #{gcn_dense_aux_forward.6} parent=0 // pred_region
    _
  $region37: #{gcn_dense_aux_forward.6} parent=0 // pred_fallthru
    _
  // Predicated region
  $region38: #{gcn_dense_aux_forward.6} parent=0 // pred_check
    _
  $region39: #{gcn_dense_aux_forward.6} parent=0 // pred_check_branch
    %1870 = sbr.rel (0) target = $region41
  $region40: #{gcn_dense_aux_forward.6} parent=0 // pred_region
    _
  $region41: #{gcn_dense_aux_forward.6} parent=0 // pred_fallthru
    _

</llo_original>
